<compile_context>
chip_gen: v5e
topology: v5e:2x2
jax: 0.10.0
libtpu: 0.0.40
codegen_flags: <defaults>
</compile_context>

<pallas_src>
import functools

import numpy as np
import jax
import jax.numpy as jnp
from jax.experimental import pallas as pl
from jax.experimental.pallas import tpu as pltpu

RESERVED_FAILURE = "__RESERVED_FAILURE__"


def _round_up(x, m):
    return (x + m - 1) // m * m


def _cdiv(a, b):
    return (a + b - 1) // b


def _pick_batch_tile(B):
    """Whole batch in one exact block when tiny; otherwise a large multiple-of-8
    tile that leaves >= 2 grid blocks (pipeline overlap + v7x dual-TC sharding)."""
    if B <= 8:
        return B
    return max(8, min(256, _round_up(_cdiv(B, 2), 8)))


# Per grid step (one batch block of BT rows):
#   x1_ref, x2_ref : (BT, V)      f32  -- probability distribution over vocab
#   idx1_ref/idx2  : (BT, S_pad)  i32  -- sampled vocab indices (S on lanes)
#   res_ref        : (BT, S_pad)  i32  -- black-box result class per sample
#   out_ref        : (BT, R_pad)  f32  -- aggregated probability per result class
def _blackbox_kernel(num_classes, x1_ref, x2_ref, idx1_ref, idx2_ref, res_ref,
                     out_ref):
    V = x1_ref.shape[-1]
    BT, S = idx1_ref.shape
    R_pad = out_ref.shape[-1]

    x1 = x1_ref[...]      # preload once; per-v column slices below are vreg ops
    x2 = x2_ref[...]
    idx1 = idx1_ref[...]  # (BT, S)
    idx2 = idx2_ref[...]
    res = res_ref[...]    # (BT, S)

    # Gather g_j[b, s] = x_j[b, idx_j[b, s]] via unrolled VPU compare + select.
    # Select-OVERWRITE: every index matches exactly one v; padded / invalid
    # indices (-1) match none so the zero init survives. No MXU.
    g1 = jnp.zeros((BT, S), jnp.float32)
    g2 = jnp.zeros((BT, S), jnp.float32)
    for v in range(V):  # V is small & static -> fully unrolled
        g1 = jnp.where(idx1 == v, x1[:, v:v + 1], g1)
        g2 = jnp.where(idx2 == v, x2[:, v:v + 1], g2)

    # result_probs[b, s] = prod_j x_j[b, idx_j[b, s]]   (k = 1 sampled index per input)
    probs = g1 * g2                                             # (BT, S)

    # OutputMapping.vectorize: out[b, r] = sum_{s : res[b,s] == r} probs[b, s]
    # Per-real-class 2-D select + XLU lane reduce; no (BT, R, S) intermediate.
    # Padded classes [num_classes, R_pad) stay zero; failure / padded samples
    # carry res == -1 and match no class.
    lane_r = jax.lax.broadcasted_iota(jnp.int32, (BT, R_pad), 1)
    acc = jnp.zeros((BT, R_pad), jnp.float32)
    for r in range(num_classes):
        col = jnp.sum(jnp.where(res == r, probs, 0.0), axis=-1, keepdims=True)
        acc = jnp.where(lane_r == r, col, acc)                  # (BT, R_pad)
    out_ref[...] = acc                                          # one full-lane store


def blackbox_forward_pallas(x1, x2, idx1, idx2, results, num_result_classes):
    """Fused result_probs (gather-product) + discrete output vectorization."""
    B, V = x1.shape
    S = idx1.shape[1]
    R = int(num_result_classes)

    # Lane-dense padding only on S / R (cheap, static); no batch padding.
    S_pad = _round_up(S, 128)
    R_pad = _round_up(R, 128)
    BT = _pick_batch_tile(B)
    grid = _cdiv(B, BT)

    def pad_lanes(a, cols, fill):
        if a.shape[1] == cols:
            return a
        return jnp.pad(a, ((0, 0), (0, cols - a.shape[1])), constant_values=fill)

    x1_f = x1.astype(jnp.float32)
    x2_f = x2.astype(jnp.float32)
    idx1_p = pad_lanes(idx1.astype(jnp.int32), S_pad, -1)
    idx2_p = pad_lanes(idx2.astype(jnp.int32), S_pad, -1)
    res_p = pad_lanes(results.astype(jnp.int32), S_pad, -1)

    kernel = functools.partial(_blackbox_kernel, R)

    out = pl.pallas_call(
        kernel,
        out_shape=jax.ShapeDtypeStruct((B, R_pad), jnp.float32),
        grid_spec=pltpu.PrefetchScalarGridSpec(
            num_scalar_prefetch=0,
            grid=(grid,),
            in_specs=[
                pl.BlockSpec((BT, V), lambda i: (i, 0)),
                pl.BlockSpec((BT, V), lambda i: (i, 0)),
                pl.BlockSpec((BT, S_pad), lambda i: (i, 0)),
                pl.BlockSpec((BT, S_pad), lambda i: (i, 0)),
                pl.BlockSpec((BT, S_pad), lambda i: (i, 0)),
            ],
            out_specs=pl.BlockSpec((BT, R_pad), lambda i: (i, 0)),
        ),
        compiler_params=pltpu.CompilerParams(
            dimension_semantics=("parallel",),       # batch blocks independent
            vmem_limit_bytes=32 * 1024 * 1024,       # ample headroom on v5e/v6e/v7x
        ),
    )(x1_f, x2_f, idx1_p, idx2_p, res_p)
    return out[:, :R]


def black_box_function(a, b):
    # Arbitrary Python callable (may raise on some inputs); here: digit addition.
    return a + b


if __name__ == "__main__":
    B, V, S = 4, 16, 64          # batch, vocab per input, sample_count
    R = 2 * V - 1                # result classes of the sum black-box

    key = jax.random.PRNGKey(0)
    k1, k2, k3, k4 = jax.random.split(key, 4)

    # forward() inputs: per-element categorical distributions (rows sum to 1).
    x1 = jax.nn.softmax(jax.random.normal(k1, (B, V)), axis=-1)
    x2 = jax.nn.softmax(jax.random.normal(k2, (B, V)), axis=-1)

    # InputMapping.sample -> sampled_indices of shape (B, S, 1); sampled elements = indices.
    idx1 = jax.random.categorical(k3, jnp.log(x1), axis=-1, shape=(S, B)).T[..., None]
    idx2 = jax.random.categorical(k4, jnp.log(x2), axis=-1, shape=(S, B)).T[..., None]
    idx1 = idx1.astype(jnp.int32)
    idx2 = idx2.astype(jnp.int32)

    # invoke_function_on_batched_inputs: pure Python per-sample loop with failure handling.
    # TODO(synk): arbitrary Python black-box callables cannot execute inside a Pallas kernel.
    idx1_np = np.asarray(idx1[..., 0])
    idx2_np = np.asarray(idx2[..., 0])
    results_np = np.full((B, S), -1, dtype=np.int32)
    for b in range(B):
        for s in range(S):
            try:
                results_np[b, s] = black_box_function(int(idx1_np[b, s]), int(idx2_np[b, s]))
            except Exception:
                results_np[b, s] = -1   # RESERVED_FAILURE -> zero probability
    results = jnp.asarray(results_np)

    out = blackbox_forward_pallas(x1, x2, idx1[..., 0], idx2[..., 0], results, R)
    out = jax.block_until_ready(out)

    # Pure-JAX reference of the hot path (gather-product + vectorize) for sanity.
    ref_probs = (jnp.take_along_axis(x1, idx1[..., 0], axis=1)
                 * jnp.take_along_axis(x2, idx2[..., 0], axis=1))
    ref_out = jnp.einsum("bsr,bs->br",
                         jax.nn.one_hot(results, R, dtype=jnp.float32), ref_probs)
    assert out.shape == (B, R)
    assert jnp.allclose(out, ref_out, atol=1e-5, rtol=1e-5), "mismatch vs reference"

    print("KERNEL_OK")
</pallas_src>

<mosaic_0001>
module attributes {stable_mosaic.version = 11 : i64} {
  func.func @_blackbox_kernel(%arg0: i32, %arg1: memref<4x16xf32, #tpu.memory_space<vmem>>, %arg2: memref<4x16xf32, #tpu.memory_space<vmem>>, %arg3: memref<4x128xi32, #tpu.memory_space<vmem>>, %arg4: memref<4x128xi32, #tpu.memory_space<vmem>>, %arg5: memref<4x128xi32, #tpu.memory_space<vmem>>, %arg6: memref<4x128xf32, #tpu.memory_space<vmem>>) attributes {dimension_semantics = [#tpu.dimension_semantics<parallel>], iteration_bounds = array<i64: 1>, scalar_prefetch = 0 : i64, scratch_operands = 0 : i64, tpu.core_type = #tpu.core_type<tc>, window_params = [{transform_indices = @transform_0, window_bounds = array<i64: 4, 16>}, {transform_indices = @transform_1, window_bounds = array<i64: 4, 16>}, {transform_indices = @transform_2, window_bounds = array<i64: 4, 128>}, {transform_indices = @transform_3, window_bounds = array<i64: 4, 128>}, {transform_indices = @transform_4, window_bounds = array<i64: 4, 128>}, {transform_indices = @transform_5, window_bounds = array<i64: 4, 128>}]} {
    %c0 = arith.constant 0 : index
    %c0_0 = arith.constant 0 : index
    %0 = vector.load %arg1[%c0, %c0_0] : memref<4x16xf32, #tpu.memory_space<vmem>>, vector<4x16xf32>
    %c0_1 = arith.constant 0 : index
    %c0_2 = arith.constant 0 : index
    %1 = vector.load %arg2[%c0_1, %c0_2] : memref<4x16xf32, #tpu.memory_space<vmem>>, vector<4x16xf32>
    %c0_3 = arith.constant 0 : index
    %c0_4 = arith.constant 0 : index
    %2 = vector.load %arg3[%c0_3, %c0_4] : memref<4x128xi32, #tpu.memory_space<vmem>>, vector<4x128xi32>
    %c0_5 = arith.constant 0 : index
    %c0_6 = arith.constant 0 : index
    %3 = vector.load %arg4[%c0_5, %c0_6] : memref<4x128xi32, #tpu.memory_space<vmem>>, vector<4x128xi32>
    %c0_7 = arith.constant 0 : index
    %c0_8 = arith.constant 0 : index
    %4 = vector.load %arg5[%c0_7, %c0_8] : memref<4x128xi32, #tpu.memory_space<vmem>>, vector<4x128xi32>
    %cst = arith.constant 0.000000e+00 : f32
    %5 = vector.broadcast %cst : f32 to vector<4x128xf32>
    %cst_9 = arith.constant 0.000000e+00 : f32
    %6 = vector.broadcast %cst_9 : f32 to vector<4x128xf32>
    %c0_i32 = arith.constant 0 : i32
    %7 = vector.broadcast %c0_i32 : i32 to vector<4x128xi32>
    %8 = arith.cmpi eq, %2, %7 : vector<4x128xi32>
    %9 = vector.extract_strided_slice %0 {offsets = [0, 0], sizes = [4, 1], strides = [1, 1]} : vector<4x16xf32> to vector<4x1xf32>
    %10 = vector.shape_cast %9 : vector<4x1xf32> to vector<4x1xf32>
    %11 = vector.broadcast %10 : vector<4x1xf32> to vector<4x128xf32>
    %12 = arith.select %8, %11, %5 : vector<4x128xi1>, vector<4x128xf32>
    %c0_i32_10 = arith.constant 0 : i32
    %13 = vector.broadcast %c0_i32_10 : i32 to vector<4x128xi32>
    %14 = arith.cmpi eq, %3, %13 : vector<4x128xi32>
    %15 = vector.extract_strided_slice %1 {offsets = [0, 0], sizes = [4, 1], strides = [1, 1]} : vector<4x16xf32> to vector<4x1xf32>
    %16 = vector.shape_cast %15 : vector<4x1xf32> to vector<4x1xf32>
    %17 = vector.broadcast %16 : vector<4x1xf32> to vector<4x128xf32>
    %18 = arith.select %14, %17, %6 : vector<4x128xi1>, vector<4x128xf32>
    %c1_i32 = arith.constant 1 : i32
    %19 = vector.broadcast %c1_i32 : i32 to vector<4x128xi32>
    %20 = arith.cmpi eq, %2, %19 : vector<4x128xi32>
    %21 = vector.extract_strided_slice %0 {offsets = [0, 1], sizes = [4, 1], strides = [1, 1]} : vector<4x16xf32> to vector<4x1xf32>
    %22 = vector.shape_cast %21 : vector<4x1xf32> to vector<4x1xf32>
    %23 = vector.broadcast %22 : vector<4x1xf32> to vector<4x128xf32>
    %24 = arith.select %20, %23, %12 : vector<4x128xi1>, vector<4x128xf32>
    %c1_i32_11 = arith.constant 1 : i32
    %25 = vector.broadcast %c1_i32_11 : i32 to vector<4x128xi32>
    %26 = arith.cmpi eq, %3, %25 : vector<4x128xi32>
    %27 = vector.extract_strided_slice %1 {offsets = [0, 1], sizes = [4, 1], strides = [1, 1]} : vector<4x16xf32> to vector<4x1xf32>
    %28 = vector.shape_cast %27 : vector<4x1xf32> to vector<4x1xf32>
    %29 = vector.broadcast %28 : vector<4x1xf32> to vector<4x128xf32>
    %30 = arith.select %26, %29, %18 : vector<4x128xi1>, vector<4x128xf32>
    %c2_i32 = arith.constant 2 : i32
    %31 = vector.broadcast %c2_i32 : i32 to vector<4x128xi32>
    %32 = arith.cmpi eq, %2, %31 : vector<4x128xi32>
    %33 = vector.extract_strided_slice %0 {offsets = [0, 2], sizes = [4, 1], strides = [1, 1]} : vector<4x16xf32> to vector<4x1xf32>
    %34 = vector.shape_cast %33 : vector<4x1xf32> to vector<4x1xf32>
    %35 = vector.broadcast %34 : vector<4x1xf32> to vector<4x128xf32>
    %36 = arith.select %32, %35, %24 : vector<4x128xi1>, vector<4x128xf32>
    %c2_i32_12 = arith.constant 2 : i32
    %37 = vector.broadcast %c2_i32_12 : i32 to vector<4x128xi32>
    %38 = arith.cmpi eq, %3, %37 : vector<4x128xi32>
    %39 = vector.extract_strided_slice %1 {offsets = [0, 2], sizes = [4, 1], strides = [1, 1]} : vector<4x16xf32> to vector<4x1xf32>
    %40 = vector.shape_cast %39 : vector<4x1xf32> to vector<4x1xf32>
    %41 = vector.broadcast %40 : vector<4x1xf32> to vector<4x128xf32>
    %42 = arith.select %38, %41, %30 : vector<4x128xi1>, vector<4x128xf32>
    %c3_i32 = arith.constant 3 : i32
    %43 = vector.broadcast %c3_i32 : i32 to vector<4x128xi32>
    %44 = arith.cmpi eq, %2, %43 : vector<4x128xi32>
    %45 = vector.extract_strided_slice %0 {offsets = [0, 3], sizes = [4, 1], strides = [1, 1]} : vector<4x16xf32> to vector<4x1xf32>
    %46 = vector.shape_cast %45 : vector<4x1xf32> to vector<4x1xf32>
    %47 = vector.broadcast %46 : vector<4x1xf32> to vector<4x128xf32>
    %48 = arith.select %44, %47, %36 : vector<4x128xi1>, vector<4x128xf32>
    %c3_i32_13 = arith.constant 3 : i32
    %49 = vector.broadcast %c3_i32_13 : i32 to vector<4x128xi32>
    %50 = arith.cmpi eq, %3, %49 : vector<4x128xi32>
    %51 = vector.extract_strided_slice %1 {offsets = [0, 3], sizes = [4, 1], strides = [1, 1]} : vector<4x16xf32> to vector<4x1xf32>
    %52 = vector.shape_cast %51 : vector<4x1xf32> to vector<4x1xf32>
    %53 = vector.broadcast %52 : vector<4x1xf32> to vector<4x128xf32>
    %54 = arith.select %50, %53, %42 : vector<4x128xi1>, vector<4x128xf32>
    %c4_i32 = arith.constant 4 : i32
    %55 = vector.broadcast %c4_i32 : i32 to vector<4x128xi32>
    %56 = arith.cmpi eq, %2, %55 : vector<4x128xi32>
    %57 = vector.extract_strided_slice %0 {offsets = [0, 4], sizes = [4, 1], strides = [1, 1]} : vector<4x16xf32> to vector<4x1xf32>
    %58 = vector.shape_cast %57 : vector<4x1xf32> to vector<4x1xf32>
    %59 = vector.broadcast %58 : vector<4x1xf32> to vector<4x128xf32>
    %60 = arith.select %56, %59, %48 : vector<4x128xi1>, vector<4x128xf32>
    %c4_i32_14 = arith.constant 4 : i32
    %61 = vector.broadcast %c4_i32_14 : i32 to vector<4x128xi32>
    %62 = arith.cmpi eq, %3, %61 : vector<4x128xi32>
    %63 = vector.extract_strided_slice %1 {offsets = [0, 4], sizes = [4, 1], strides = [1, 1]} : vector<4x16xf32> to vector<4x1xf32>
    %64 = vector.shape_cast %63 : vector<4x1xf32> to vector<4x1xf32>
    %65 = vector.broadcast %64 : vector<4x1xf32> to vector<4x128xf32>
    %66 = arith.select %62, %65, %54 : vector<4x128xi1>, vector<4x128xf32>
    %c5_i32 = arith.constant 5 : i32
    %67 = vector.broadcast %c5_i32 : i32 to vector<4x128xi32>
    %68 = arith.cmpi eq, %2, %67 : vector<4x128xi32>
    %69 = vector.extract_strided_slice %0 {offsets = [0, 5], sizes = [4, 1], strides = [1, 1]} : vector<4x16xf32> to vector<4x1xf32>
    %70 = vector.shape_cast %69 : vector<4x1xf32> to vector<4x1xf32>
    %71 = vector.broadcast %70 : vector<4x1xf32> to vector<4x128xf32>
    %72 = arith.select %68, %71, %60 : vector<4x128xi1>, vector<4x128xf32>
    %c5_i32_15 = arith.constant 5 : i32
    %73 = vector.broadcast %c5_i32_15 : i32 to vector<4x128xi32>
    %74 = arith.cmpi eq, %3, %73 : vector<4x128xi32>
    %75 = vector.extract_strided_slice %1 {offsets = [0, 5], sizes = [4, 1], strides = [1, 1]} : vector<4x16xf32> to vector<4x1xf32>
    %76 = vector.shape_cast %75 : vector<4x1xf32> to vector<4x1xf32>
    %77 = vector.broadcast %76 : vector<4x1xf32> to vector<4x128xf32>
    %78 = arith.select %74, %77, %66 : vector<4x128xi1>, vector<4x128xf32>
    %c6_i32 = arith.constant 6 : i32
    %79 = vector.broadcast %c6_i32 : i32 to vector<4x128xi32>
    %80 = arith.cmpi eq, %2, %79 : vector<4x128xi32>
    %81 = vector.extract_strided_slice %0 {offsets = [0, 6], sizes = [4, 1], strides = [1, 1]} : vector<4x16xf32> to vector<4x1xf32>
    %82 = vector.shape_cast %81 : vector<4x1xf32> to vector<4x1xf32>
    %83 = vector.broadcast %82 : vector<4x1xf32> to vector<4x128xf32>
    %84 = arith.select %80, %83, %72 : vector<4x128xi1>, vector<4x128xf32>
    %c6_i32_16 = arith.constant 6 : i32
    %85 = vector.broadcast %c6_i32_16 : i32 to vector<4x128xi32>
    %86 = arith.cmpi eq, %3, %85 : vector<4x128xi32>
    %87 = vector.extract_strided_slice %1 {offsets = [0, 6], sizes = [4, 1], strides = [1, 1]} : vector<4x16xf32> to vector<4x1xf32>
    %88 = vector.shape_cast %87 : vector<4x1xf32> to vector<4x1xf32>
    %89 = vector.broadcast %88 : vector<4x1xf32> to vector<4x128xf32>
    %90 = arith.select %86, %89, %78 : vector<4x128xi1>, vector<4x128xf32>
    %c7_i32 = arith.constant 7 : i32
    %91 = vector.broadcast %c7_i32 : i32 to vector<4x128xi32>
    %92 = arith.cmpi eq, %2, %91 : vector<4x128xi32>
    %93 = vector.extract_strided_slice %0 {offsets = [0, 7], sizes = [4, 1], strides = [1, 1]} : vector<4x16xf32> to vector<4x1xf32>
    %94 = vector.shape_cast %93 : vector<4x1xf32> to vector<4x1xf32>
    %95 = vector.broadcast %94 : vector<4x1xf32> to vector<4x128xf32>
    %96 = arith.select %92, %95, %84 : vector<4x128xi1>, vector<4x128xf32>
    %c7_i32_17 = arith.constant 7 : i32
    %97 = vector.broadcast %c7_i32_17 : i32 to vector<4x128xi32>
    %98 = arith.cmpi eq, %3, %97 : vector<4x128xi32>
    %99 = vector.extract_strided_slice %1 {offsets = [0, 7], sizes = [4, 1], strides = [1, 1]} : vector<4x16xf32> to vector<4x1xf32>
    %100 = vector.shape_cast %99 : vector<4x1xf32> to vector<4x1xf32>
    %101 = vector.broadcast %100 : vector<4x1xf32> to vector<4x128xf32>
    %102 = arith.select %98, %101, %90 : vector<4x128xi1>, vector<4x128xf32>
    %c8_i32 = arith.constant 8 : i32
    %103 = vector.broadcast %c8_i32 : i32 to vector<4x128xi32>
    %104 = arith.cmpi eq, %2, %103 : vector<4x128xi32>
    %105 = vector.extract_strided_slice %0 {offsets = [0, 8], sizes = [4, 1], strides = [1, 1]} : vector<4x16xf32> to vector<4x1xf32>
    %106 = vector.shape_cast %105 : vector<4x1xf32> to vector<4x1xf32>
    %107 = vector.broadcast %106 : vector<4x1xf32> to vector<4x128xf32>
    %108 = arith.select %104, %107, %96 : vector<4x128xi1>, vector<4x128xf32>
    %c8_i32_18 = arith.constant 8 : i32
    %109 = vector.broadcast %c8_i32_18 : i32 to vector<4x128xi32>
    %110 = arith.cmpi eq, %3, %109 : vector<4x128xi32>
    %111 = vector.extract_strided_slice %1 {offsets = [0, 8], sizes = [4, 1], strides = [1, 1]} : vector<4x16xf32> to vector<4x1xf32>
    %112 = vector.shape_cast %111 : vector<4x1xf32> to vector<4x1xf32>
    %113 = vector.broadcast %112 : vector<4x1xf32> to vector<4x128xf32>
    %114 = arith.select %110, %113, %102 : vector<4x128xi1>, vector<4x128xf32>
    %c9_i32 = arith.constant 9 : i32
    %115 = vector.broadcast %c9_i32 : i32 to vector<4x128xi32>
    %116 = arith.cmpi eq, %2, %115 : vector<4x128xi32>
    %117 = vector.extract_strided_slice %0 {offsets = [0, 9], sizes = [4, 1], strides = [1, 1]} : vector<4x16xf32> to vector<4x1xf32>
    %118 = vector.shape_cast %117 : vector<4x1xf32> to vector<4x1xf32>
    %119 = vector.broadcast %118 : vector<4x1xf32> to vector<4x128xf32>
    %120 = arith.select %116, %119, %108 : vector<4x128xi1>, vector<4x128xf32>
    %c9_i32_19 = arith.constant 9 : i32
    %121 = vector.broadcast %c9_i32_19 : i32 to vector<4x128xi32>
    %122 = arith.cmpi eq, %3, %121 : vector<4x128xi32>
    %123 = vector.extract_strided_slice %1 {offsets = [0, 9], sizes = [4, 1], strides = [1, 1]} : vector<4x16xf32> to vector<4x1xf32>
    %124 = vector.shape_cast %123 : vector<4x1xf32> to vector<4x1xf32>
    %125 = vector.broadcast %124 : vector<4x1xf32> to vector<4x128xf32>
    %126 = arith.select %122, %125, %114 : vector<4x128xi1>, vector<4x128xf32>
    %c10_i32 = arith.constant 10 : i32
    %127 = vector.broadcast %c10_i32 : i32 to vector<4x128xi32>
    %128 = arith.cmpi eq, %2, %127 : vector<4x128xi32>
    %129 = vector.extract_strided_slice %0 {offsets = [0, 10], sizes = [4, 1], strides = [1, 1]} : vector<4x16xf32> to vector<4x1xf32>
    %130 = vector.shape_cast %129 : vector<4x1xf32> to vector<4x1xf32>
    %131 = vector.broadcast %130 : vector<4x1xf32> to vector<4x128xf32>
    %132 = arith.select %128, %131, %120 : vector<4x128xi1>, vector<4x128xf32>
    %c10_i32_20 = arith.constant 10 : i32
    %133 = vector.broadcast %c10_i32_20 : i32 to vector<4x128xi32>
    %134 = arith.cmpi eq, %3, %133 : vector<4x128xi32>
    %135 = vector.extract_strided_slice %1 {offsets = [0, 10], sizes = [4, 1], strides = [1, 1]} : vector<4x16xf32> to vector<4x1xf32>
    %136 = vector.shape_cast %135 : vector<4x1xf32> to vector<4x1xf32>
    %137 = vector.broadcast %136 : vector<4x1xf32> to vector<4x128xf32>
    %138 = arith.select %134, %137, %126 : vector<4x128xi1>, vector<4x128xf32>
    %c11_i32 = arith.constant 11 : i32
    %139 = vector.broadcast %c11_i32 : i32 to vector<4x128xi32>
    %140 = arith.cmpi eq, %2, %139 : vector<4x128xi32>
    %141 = vector.extract_strided_slice %0 {offsets = [0, 11], sizes = [4, 1], strides = [1, 1]} : vector<4x16xf32> to vector<4x1xf32>
    %142 = vector.shape_cast %141 : vector<4x1xf32> to vector<4x1xf32>
    %143 = vector.broadcast %142 : vector<4x1xf32> to vector<4x128xf32>
    %144 = arith.select %140, %143, %132 : vector<4x128xi1>, vector<4x128xf32>
    %c11_i32_21 = arith.constant 11 : i32
    %145 = vector.broadcast %c11_i32_21 : i32 to vector<4x128xi32>
    %146 = arith.cmpi eq, %3, %145 : vector<4x128xi32>
    %147 = vector.extract_strided_slice %1 {offsets = [0, 11], sizes = [4, 1], strides = [1, 1]} : vector<4x16xf32> to vector<4x1xf32>
    %148 = vector.shape_cast %147 : vector<4x1xf32> to vector<4x1xf32>
    %149 = vector.broadcast %148 : vector<4x1xf32> to vector<4x128xf32>
    %150 = arith.select %146, %149, %138 : vector<4x128xi1>, vector<4x128xf32>
    %c12_i32 = arith.constant 12 : i32
    %151 = vector.broadcast %c12_i32 : i32 to vector<4x128xi32>
    %152 = arith.cmpi eq, %2, %151 : vector<4x128xi32>
    %153 = vector.extract_strided_slice %0 {offsets = [0, 12], sizes = [4, 1], strides = [1, 1]} : vector<4x16xf32> to vector<4x1xf32>
    %154 = vector.shape_cast %153 : vector<4x1xf32> to vector<4x1xf32>
    %155 = vector.broadcast %154 : vector<4x1xf32> to vector<4x128xf32>
    %156 = arith.select %152, %155, %144 : vector<4x128xi1>, vector<4x128xf32>
    %c12_i32_22 = arith.constant 12 : i32
    %157 = vector.broadcast %c12_i32_22 : i32 to vector<4x128xi32>
    %158 = arith.cmpi eq, %3, %157 : vector<4x128xi32>
    %159 = vector.extract_strided_slice %1 {offsets = [0, 12], sizes = [4, 1], strides = [1, 1]} : vector<4x16xf32> to vector<4x1xf32>
    %160 = vector.shape_cast %159 : vector<4x1xf32> to vector<4x1xf32>
    %161 = vector.broadcast %160 : vector<4x1xf32> to vector<4x128xf32>
    %162 = arith.select %158, %161, %150 : vector<4x128xi1>, vector<4x128xf32>
    %c13_i32 = arith.constant 13 : i32
    %163 = vector.broadcast %c13_i32 : i32 to vector<4x128xi32>
    %164 = arith.cmpi eq, %2, %163 : vector<4x128xi32>
    %165 = vector.extract_strided_slice %0 {offsets = [0, 13], sizes = [4, 1], strides = [1, 1]} : vector<4x16xf32> to vector<4x1xf32>
    %166 = vector.shape_cast %165 : vector<4x1xf32> to vector<4x1xf32>
    %167 = vector.broadcast %166 : vector<4x1xf32> to vector<4x128xf32>
    %168 = arith.select %164, %167, %156 : vector<4x128xi1>, vector<4x128xf32>
    %c13_i32_23 = arith.constant 13 : i32
    %169 = vector.broadcast %c13_i32_23 : i32 to vector<4x128xi32>
    %170 = arith.cmpi eq, %3, %169 : vector<4x128xi32>
    %171 = vector.extract_strided_slice %1 {offsets = [0, 13], sizes = [4, 1], strides = [1, 1]} : vector<4x16xf32> to vector<4x1xf32>
    %172 = vector.shape_cast %171 : vector<4x1xf32> to vector<4x1xf32>
    %173 = vector.broadcast %172 : vector<4x1xf32> to vector<4x128xf32>
    %174 = arith.select %170, %173, %162 : vector<4x128xi1>, vector<4x128xf32>
    %c14_i32 = arith.constant 14 : i32
    %175 = vector.broadcast %c14_i32 : i32 to vector<4x128xi32>
    %176 = arith.cmpi eq, %2, %175 : vector<4x128xi32>
    %177 = vector.extract_strided_slice %0 {offsets = [0, 14], sizes = [4, 1], strides = [1, 1]} : vector<4x16xf32> to vector<4x1xf32>
    %178 = vector.shape_cast %177 : vector<4x1xf32> to vector<4x1xf32>
    %179 = vector.broadcast %178 : vector<4x1xf32> to vector<4x128xf32>
    %180 = arith.select %176, %179, %168 : vector<4x128xi1>, vector<4x128xf32>
    %c14_i32_24 = arith.constant 14 : i32
    %181 = vector.broadcast %c14_i32_24 : i32 to vector<4x128xi32>
    %182 = arith.cmpi eq, %3, %181 : vector<4x128xi32>
    %183 = vector.extract_strided_slice %1 {offsets = [0, 14], sizes = [4, 1], strides = [1, 1]} : vector<4x16xf32> to vector<4x1xf32>
    %184 = vector.shape_cast %183 : vector<4x1xf32> to vector<4x1xf32>
    %185 = vector.broadcast %184 : vector<4x1xf32> to vector<4x128xf32>
    %186 = arith.select %182, %185, %174 : vector<4x128xi1>, vector<4x128xf32>
    %c15_i32 = arith.constant 15 : i32
    %187 = vector.broadcast %c15_i32 : i32 to vector<4x128xi32>
    %188 = arith.cmpi eq, %2, %187 : vector<4x128xi32>
    %189 = vector.extract_strided_slice %0 {offsets = [0, 15], sizes = [4, 1], strides = [1, 1]} : vector<4x16xf32> to vector<4x1xf32>
    %190 = vector.shape_cast %189 : vector<4x1xf32> to vector<4x1xf32>
    %191 = vector.broadcast %190 : vector<4x1xf32> to vector<4x128xf32>
    %192 = arith.select %188, %191, %180 : vector<4x128xi1>, vector<4x128xf32>
    %c15_i32_25 = arith.constant 15 : i32
    %193 = vector.broadcast %c15_i32_25 : i32 to vector<4x128xi32>
    %194 = arith.cmpi eq, %3, %193 : vector<4x128xi32>
    %195 = vector.extract_strided_slice %1 {offsets = [0, 15], sizes = [4, 1], strides = [1, 1]} : vector<4x16xf32> to vector<4x1xf32>
    %196 = vector.shape_cast %195 : vector<4x1xf32> to vector<4x1xf32>
    %197 = vector.broadcast %196 : vector<4x1xf32> to vector<4x128xf32>
    %198 = arith.select %194, %197, %186 : vector<4x128xi1>, vector<4x128xf32>
    %199 = arith.mulf %192, %198 : vector<4x128xf32>
    %200 = tpu.iota {dimensions = array<i32: 1>} : vector<4x128xi32>
    %cst_26 = arith.constant 0.000000e+00 : f32
    %201 = vector.broadcast %cst_26 : f32 to vector<4x128xf32>
    %c0_i32_27 = arith.constant 0 : i32
    %202 = vector.broadcast %c0_i32_27 : i32 to vector<4x128xi32>
    %203 = arith.cmpi eq, %4, %202 : vector<4x128xi32>
    %cst_28 = arith.constant 0.000000e+00 : f32
    %204 = vector.broadcast %cst_28 : f32 to vector<4x128xf32>
    %205 = arith.select %203, %199, %204 : vector<4x128xi1>, vector<4x128xf32>
    %cst_29 = arith.constant dense<0.000000e+00> : vector<4xf32>
    %206 = vector.multi_reduction <add>, %205, %cst_29 [1] : vector<4x128xf32> to vector<4xf32>
    %207 = vector.shape_cast %206 : vector<4xf32> to vector<4x1xf32>
    %c0_i32_30 = arith.constant 0 : i32
    %208 = vector.broadcast %c0_i32_30 : i32 to vector<4x128xi32>
    %209 = arith.cmpi eq, %200, %208 : vector<4x128xi32>
    %210 = vector.shape_cast %207 : vector<4x1xf32> to vector<4x1xf32>
    %211 = vector.broadcast %210 : vector<4x1xf32> to vector<4x128xf32>
    %212 = arith.select %209, %211, %201 : vector<4x128xi1>, vector<4x128xf32>
    %c1_i32_31 = arith.constant 1 : i32
    %213 = vector.broadcast %c1_i32_31 : i32 to vector<4x128xi32>
    %214 = arith.cmpi eq, %4, %213 : vector<4x128xi32>
    %cst_32 = arith.constant 0.000000e+00 : f32
    %215 = vector.broadcast %cst_32 : f32 to vector<4x128xf32>
    %216 = arith.select %214, %199, %215 : vector<4x128xi1>, vector<4x128xf32>
    %cst_33 = arith.constant dense<0.000000e+00> : vector<4xf32>
    %217 = vector.multi_reduction <add>, %216, %cst_33 [1] : vector<4x128xf32> to vector<4xf32>
    %218 = vector.shape_cast %217 : vector<4xf32> to vector<4x1xf32>
    %c1_i32_34 = arith.constant 1 : i32
    %219 = vector.broadcast %c1_i32_34 : i32 to vector<4x128xi32>
    %220 = arith.cmpi eq, %200, %219 : vector<4x128xi32>
    %221 = vector.shape_cast %218 : vector<4x1xf32> to vector<4x1xf32>
    %222 = vector.broadcast %221 : vector<4x1xf32> to vector<4x128xf32>
    %223 = arith.select %220, %222, %212 : vector<4x128xi1>, vector<4x128xf32>
    %c2_i32_35 = arith.constant 2 : i32
    %224 = vector.broadcast %c2_i32_35 : i32 to vector<4x128xi32>
    %225 = arith.cmpi eq, %4, %224 : vector<4x128xi32>
    %cst_36 = arith.constant 0.000000e+00 : f32
    %226 = vector.broadcast %cst_36 : f32 to vector<4x128xf32>
    %227 = arith.select %225, %199, %226 : vector<4x128xi1>, vector<4x128xf32>
    %cst_37 = arith.constant dense<0.000000e+00> : vector<4xf32>
    %228 = vector.multi_reduction <add>, %227, %cst_37 [1] : vector<4x128xf32> to vector<4xf32>
    %229 = vector.shape_cast %228 : vector<4xf32> to vector<4x1xf32>
    %c2_i32_38 = arith.constant 2 : i32
    %230 = vector.broadcast %c2_i32_38 : i32 to vector<4x128xi32>
    %231 = arith.cmpi eq, %200, %230 : vector<4x128xi32>
    %232 = vector.shape_cast %229 : vector<4x1xf32> to vector<4x1xf32>
    %233 = vector.broadcast %232 : vector<4x1xf32> to vector<4x128xf32>
    %234 = arith.select %231, %233, %223 : vector<4x128xi1>, vector<4x128xf32>
    %c3_i32_39 = arith.constant 3 : i32
    %235 = vector.broadcast %c3_i32_39 : i32 to vector<4x128xi32>
    %236 = arith.cmpi eq, %4, %235 : vector<4x128xi32>
    %cst_40 = arith.constant 0.000000e+00 : f32
    %237 = vector.broadcast %cst_40 : f32 to vector<4x128xf32>
    %238 = arith.select %236, %199, %237 : vector<4x128xi1>, vector<4x128xf32>
    %cst_41 = arith.constant dense<0.000000e+00> : vector<4xf32>
    %239 = vector.multi_reduction <add>, %238, %cst_41 [1] : vector<4x128xf32> to vector<4xf32>
    %240 = vector.shape_cast %239 : vector<4xf32> to vector<4x1xf32>
    %c3_i32_42 = arith.constant 3 : i32
    %241 = vector.broadcast %c3_i32_42 : i32 to vector<4x128xi32>
    %242 = arith.cmpi eq, %200, %241 : vector<4x128xi32>
    %243 = vector.shape_cast %240 : vector<4x1xf32> to vector<4x1xf32>
    %244 = vector.broadcast %243 : vector<4x1xf32> to vector<4x128xf32>
    %245 = arith.select %242, %244, %234 : vector<4x128xi1>, vector<4x128xf32>
    %c4_i32_43 = arith.constant 4 : i32
    %246 = vector.broadcast %c4_i32_43 : i32 to vector<4x128xi32>
    %247 = arith.cmpi eq, %4, %246 : vector<4x128xi32>
    %cst_44 = arith.constant 0.000000e+00 : f32
    %248 = vector.broadcast %cst_44 : f32 to vector<4x128xf32>
    %249 = arith.select %247, %199, %248 : vector<4x128xi1>, vector<4x128xf32>
    %cst_45 = arith.constant dense<0.000000e+00> : vector<4xf32>
    %250 = vector.multi_reduction <add>, %249, %cst_45 [1] : vector<4x128xf32> to vector<4xf32>
    %251 = vector.shape_cast %250 : vector<4xf32> to vector<4x1xf32>
    %c4_i32_46 = arith.constant 4 : i32
    %252 = vector.broadcast %c4_i32_46 : i32 to vector<4x128xi32>
    %253 = arith.cmpi eq, %200, %252 : vector<4x128xi32>
    %254 = vector.shape_cast %251 : vector<4x1xf32> to vector<4x1xf32>
    %255 = vector.broadcast %254 : vector<4x1xf32> to vector<4x128xf32>
    %256 = arith.select %253, %255, %245 : vector<4x128xi1>, vector<4x128xf32>
    %c5_i32_47 = arith.constant 5 : i32
    %257 = vector.broadcast %c5_i32_47 : i32 to vector<4x128xi32>
    %258 = arith.cmpi eq, %4, %257 : vector<4x128xi32>
    %cst_48 = arith.constant 0.000000e+00 : f32
    %259 = vector.broadcast %cst_48 : f32 to vector<4x128xf32>
    %260 = arith.select %258, %199, %259 : vector<4x128xi1>, vector<4x128xf32>
    %cst_49 = arith.constant dense<0.000000e+00> : vector<4xf32>
    %261 = vector.multi_reduction <add>, %260, %cst_49 [1] : vector<4x128xf32> to vector<4xf32>
    %262 = vector.shape_cast %261 : vector<4xf32> to vector<4x1xf32>
    %c5_i32_50 = arith.constant 5 : i32
    %263 = vector.broadcast %c5_i32_50 : i32 to vector<4x128xi32>
    %264 = arith.cmpi eq, %200, %263 : vector<4x128xi32>
    %265 = vector.shape_cast %262 : vector<4x1xf32> to vector<4x1xf32>
    %266 = vector.broadcast %265 : vector<4x1xf32> to vector<4x128xf32>
    %267 = arith.select %264, %266, %256 : vector<4x128xi1>, vector<4x128xf32>
    %c6_i32_51 = arith.constant 6 : i32
    %268 = vector.broadcast %c6_i32_51 : i32 to vector<4x128xi32>
    %269 = arith.cmpi eq, %4, %268 : vector<4x128xi32>
    %cst_52 = arith.constant 0.000000e+00 : f32
    %270 = vector.broadcast %cst_52 : f32 to vector<4x128xf32>
    %271 = arith.select %269, %199, %270 : vector<4x128xi1>, vector<4x128xf32>
    %cst_53 = arith.constant dense<0.000000e+00> : vector<4xf32>
    %272 = vector.multi_reduction <add>, %271, %cst_53 [1] : vector<4x128xf32> to vector<4xf32>
    %273 = vector.shape_cast %272 : vector<4xf32> to vector<4x1xf32>
    %c6_i32_54 = arith.constant 6 : i32
    %274 = vector.broadcast %c6_i32_54 : i32 to vector<4x128xi32>
    %275 = arith.cmpi eq, %200, %274 : vector<4x128xi32>
    %276 = vector.shape_cast %273 : vector<4x1xf32> to vector<4x1xf32>
    %277 = vector.broadcast %276 : vector<4x1xf32> to vector<4x128xf32>
    %278 = arith.select %275, %277, %267 : vector<4x128xi1>, vector<4x128xf32>
    %c7_i32_55 = arith.constant 7 : i32
    %279 = vector.broadcast %c7_i32_55 : i32 to vector<4x128xi32>
    %280 = arith.cmpi eq, %4, %279 : vector<4x128xi32>
    %cst_56 = arith.constant 0.000000e+00 : f32
    %281 = vector.broadcast %cst_56 : f32 to vector<4x128xf32>
    %282 = arith.select %280, %199, %281 : vector<4x128xi1>, vector<4x128xf32>
    %cst_57 = arith.constant dense<0.000000e+00> : vector<4xf32>
    %283 = vector.multi_reduction <add>, %282, %cst_57 [1] : vector<4x128xf32> to vector<4xf32>
    %284 = vector.shape_cast %283 : vector<4xf32> to vector<4x1xf32>
    %c7_i32_58 = arith.constant 7 : i32
    %285 = vector.broadcast %c7_i32_58 : i32 to vector<4x128xi32>
    %286 = arith.cmpi eq, %200, %285 : vector<4x128xi32>
    %287 = vector.shape_cast %284 : vector<4x1xf32> to vector<4x1xf32>
    %288 = vector.broadcast %287 : vector<4x1xf32> to vector<4x128xf32>
    %289 = arith.select %286, %288, %278 : vector<4x128xi1>, vector<4x128xf32>
    %c8_i32_59 = arith.constant 8 : i32
    %290 = vector.broadcast %c8_i32_59 : i32 to vector<4x128xi32>
    %291 = arith.cmpi eq, %4, %290 : vector<4x128xi32>
    %cst_60 = arith.constant 0.000000e+00 : f32
    %292 = vector.broadcast %cst_60 : f32 to vector<4x128xf32>
    %293 = arith.select %291, %199, %292 : vector<4x128xi1>, vector<4x128xf32>
    %cst_61 = arith.constant dense<0.000000e+00> : vector<4xf32>
    %294 = vector.multi_reduction <add>, %293, %cst_61 [1] : vector<4x128xf32> to vector<4xf32>
    %295 = vector.shape_cast %294 : vector<4xf32> to vector<4x1xf32>
    %c8_i32_62 = arith.constant 8 : i32
    %296 = vector.broadcast %c8_i32_62 : i32 to vector<4x128xi32>
    %297 = arith.cmpi eq, %200, %296 : vector<4x128xi32>
    %298 = vector.shape_cast %295 : vector<4x1xf32> to vector<4x1xf32>
    %299 = vector.broadcast %298 : vector<4x1xf32> to vector<4x128xf32>
    %300 = arith.select %297, %299, %289 : vector<4x128xi1>, vector<4x128xf32>
    %c9_i32_63 = arith.constant 9 : i32
    %301 = vector.broadcast %c9_i32_63 : i32 to vector<4x128xi32>
    %302 = arith.cmpi eq, %4, %301 : vector<4x128xi32>
    %cst_64 = arith.constant 0.000000e+00 : f32
    %303 = vector.broadcast %cst_64 : f32 to vector<4x128xf32>
    %304 = arith.select %302, %199, %303 : vector<4x128xi1>, vector<4x128xf32>
    %cst_65 = arith.constant dense<0.000000e+00> : vector<4xf32>
    %305 = vector.multi_reduction <add>, %304, %cst_65 [1] : vector<4x128xf32> to vector<4xf32>
    %306 = vector.shape_cast %305 : vector<4xf32> to vector<4x1xf32>
    %c9_i32_66 = arith.constant 9 : i32
    %307 = vector.broadcast %c9_i32_66 : i32 to vector<4x128xi32>
    %308 = arith.cmpi eq, %200, %307 : vector<4x128xi32>
    %309 = vector.shape_cast %306 : vector<4x1xf32> to vector<4x1xf32>
    %310 = vector.broadcast %309 : vector<4x1xf32> to vector<4x128xf32>
    %311 = arith.select %308, %310, %300 : vector<4x128xi1>, vector<4x128xf32>
    %c10_i32_67 = arith.constant 10 : i32
    %312 = vector.broadcast %c10_i32_67 : i32 to vector<4x128xi32>
    %313 = arith.cmpi eq, %4, %312 : vector<4x128xi32>
    %cst_68 = arith.constant 0.000000e+00 : f32
    %314 = vector.broadcast %cst_68 : f32 to vector<4x128xf32>
    %315 = arith.select %313, %199, %314 : vector<4x128xi1>, vector<4x128xf32>
    %cst_69 = arith.constant dense<0.000000e+00> : vector<4xf32>
    %316 = vector.multi_reduction <add>, %315, %cst_69 [1] : vector<4x128xf32> to vector<4xf32>
    %317 = vector.shape_cast %316 : vector<4xf32> to vector<4x1xf32>
    %c10_i32_70 = arith.constant 10 : i32
    %318 = vector.broadcast %c10_i32_70 : i32 to vector<4x128xi32>
    %319 = arith.cmpi eq, %200, %318 : vector<4x128xi32>
    %320 = vector.shape_cast %317 : vector<4x1xf32> to vector<4x1xf32>
    %321 = vector.broadcast %320 : vector<4x1xf32> to vector<4x128xf32>
    %322 = arith.select %319, %321, %311 : vector<4x128xi1>, vector<4x128xf32>
    %c11_i32_71 = arith.constant 11 : i32
    %323 = vector.broadcast %c11_i32_71 : i32 to vector<4x128xi32>
    %324 = arith.cmpi eq, %4, %323 : vector<4x128xi32>
    %cst_72 = arith.constant 0.000000e+00 : f32
    %325 = vector.broadcast %cst_72 : f32 to vector<4x128xf32>
    %326 = arith.select %324, %199, %325 : vector<4x128xi1>, vector<4x128xf32>
    %cst_73 = arith.constant dense<0.000000e+00> : vector<4xf32>
    %327 = vector.multi_reduction <add>, %326, %cst_73 [1] : vector<4x128xf32> to vector<4xf32>
    %328 = vector.shape_cast %327 : vector<4xf32> to vector<4x1xf32>
    %c11_i32_74 = arith.constant 11 : i32
    %329 = vector.broadcast %c11_i32_74 : i32 to vector<4x128xi32>
    %330 = arith.cmpi eq, %200, %329 : vector<4x128xi32>
    %331 = vector.shape_cast %328 : vector<4x1xf32> to vector<4x1xf32>
    %332 = vector.broadcast %331 : vector<4x1xf32> to vector<4x128xf32>
    %333 = arith.select %330, %332, %322 : vector<4x128xi1>, vector<4x128xf32>
    %c12_i32_75 = arith.constant 12 : i32
    %334 = vector.broadcast %c12_i32_75 : i32 to vector<4x128xi32>
    %335 = arith.cmpi eq, %4, %334 : vector<4x128xi32>
    %cst_76 = arith.constant 0.000000e+00 : f32
    %336 = vector.broadcast %cst_76 : f32 to vector<4x128xf32>
    %337 = arith.select %335, %199, %336 : vector<4x128xi1>, vector<4x128xf32>
    %cst_77 = arith.constant dense<0.000000e+00> : vector<4xf32>
    %338 = vector.multi_reduction <add>, %337, %cst_77 [1] : vector<4x128xf32> to vector<4xf32>
    %339 = vector.shape_cast %338 : vector<4xf32> to vector<4x1xf32>
    %c12_i32_78 = arith.constant 12 : i32
    %340 = vector.broadcast %c12_i32_78 : i32 to vector<4x128xi32>
    %341 = arith.cmpi eq, %200, %340 : vector<4x128xi32>
    %342 = vector.shape_cast %339 : vector<4x1xf32> to vector<4x1xf32>
    %343 = vector.broadcast %342 : vector<4x1xf32> to vector<4x128xf32>
    %344 = arith.select %341, %343, %333 : vector<4x128xi1>, vector<4x128xf32>
    %c13_i32_79 = arith.constant 13 : i32
    %345 = vector.broadcast %c13_i32_79 : i32 to vector<4x128xi32>
    %346 = arith.cmpi eq, %4, %345 : vector<4x128xi32>
    %cst_80 = arith.constant 0.000000e+00 : f32
    %347 = vector.broadcast %cst_80 : f32 to vector<4x128xf32>
    %348 = arith.select %346, %199, %347 : vector<4x128xi1>, vector<4x128xf32>
    %cst_81 = arith.constant dense<0.000000e+00> : vector<4xf32>
    %349 = vector.multi_reduction <add>, %348, %cst_81 [1] : vector<4x128xf32> to vector<4xf32>
    %350 = vector.shape_cast %349 : vector<4xf32> to vector<4x1xf32>
    %c13_i32_82 = arith.constant 13 : i32
    %351 = vector.broadcast %c13_i32_82 : i32 to vector<4x128xi32>
    %352 = arith.cmpi eq, %200, %351 : vector<4x128xi32>
    %353 = vector.shape_cast %350 : vector<4x1xf32> to vector<4x1xf32>
    %354 = vector.broadcast %353 : vector<4x1xf32> to vector<4x128xf32>
    %355 = arith.select %352, %354, %344 : vector<4x128xi1>, vector<4x128xf32>
    %c14_i32_83 = arith.constant 14 : i32
    %356 = vector.broadcast %c14_i32_83 : i32 to vector<4x128xi32>
    %357 = arith.cmpi eq, %4, %356 : vector<4x128xi32>
    %cst_84 = arith.constant 0.000000e+00 : f32
    %358 = vector.broadcast %cst_84 : f32 to vector<4x128xf32>
    %359 = arith.select %357, %199, %358 : vector<4x128xi1>, vector<4x128xf32>
    %cst_85 = arith.constant dense<0.000000e+00> : vector<4xf32>
    %360 = vector.multi_reduction <add>, %359, %cst_85 [1] : vector<4x128xf32> to vector<4xf32>
    %361 = vector.shape_cast %360 : vector<4xf32> to vector<4x1xf32>
    %c14_i32_86 = arith.constant 14 : i32
    %362 = vector.broadcast %c14_i32_86 : i32 to vector<4x128xi32>
    %363 = arith.cmpi eq, %200, %362 : vector<4x128xi32>
    %364 = vector.shape_cast %361 : vector<4x1xf32> to vector<4x1xf32>
    %365 = vector.broadcast %364 : vector<4x1xf32> to vector<4x128xf32>
    %366 = arith.select %363, %365, %355 : vector<4x128xi1>, vector<4x128xf32>
    %c15_i32_87 = arith.constant 15 : i32
    %367 = vector.broadcast %c15_i32_87 : i32 to vector<4x128xi32>
    %368 = arith.cmpi eq, %4, %367 : vector<4x128xi32>
    %cst_88 = arith.constant 0.000000e+00 : f32
    %369 = vector.broadcast %cst_88 : f32 to vector<4x128xf32>
    %370 = arith.select %368, %199, %369 : vector<4x128xi1>, vector<4x128xf32>
    %cst_89 = arith.constant dense<0.000000e+00> : vector<4xf32>
    %371 = vector.multi_reduction <add>, %370, %cst_89 [1] : vector<4x128xf32> to vector<4xf32>
    %372 = vector.shape_cast %371 : vector<4xf32> to vector<4x1xf32>
    %c15_i32_90 = arith.constant 15 : i32
    %373 = vector.broadcast %c15_i32_90 : i32 to vector<4x128xi32>
    %374 = arith.cmpi eq, %200, %373 : vector<4x128xi32>
    %375 = vector.shape_cast %372 : vector<4x1xf32> to vector<4x1xf32>
    %376 = vector.broadcast %375 : vector<4x1xf32> to vector<4x128xf32>
    %377 = arith.select %374, %376, %366 : vector<4x128xi1>, vector<4x128xf32>
    %c16_i32 = arith.constant 16 : i32
    %378 = vector.broadcast %c16_i32 : i32 to vector<4x128xi32>
    %379 = arith.cmpi eq, %4, %378 : vector<4x128xi32>
    %cst_91 = arith.constant 0.000000e+00 : f32
    %380 = vector.broadcast %cst_91 : f32 to vector<4x128xf32>
    %381 = arith.select %379, %199, %380 : vector<4x128xi1>, vector<4x128xf32>
    %cst_92 = arith.constant dense<0.000000e+00> : vector<4xf32>
    %382 = vector.multi_reduction <add>, %381, %cst_92 [1] : vector<4x128xf32> to vector<4xf32>
    %383 = vector.shape_cast %382 : vector<4xf32> to vector<4x1xf32>
    %c16_i32_93 = arith.constant 16 : i32
    %384 = vector.broadcast %c16_i32_93 : i32 to vector<4x128xi32>
    %385 = arith.cmpi eq, %200, %384 : vector<4x128xi32>
    %386 = vector.shape_cast %383 : vector<4x1xf32> to vector<4x1xf32>
    %387 = vector.broadcast %386 : vector<4x1xf32> to vector<4x128xf32>
    %388 = arith.select %385, %387, %377 : vector<4x128xi1>, vector<4x128xf32>
    %c17_i32 = arith.constant 17 : i32
    %389 = vector.broadcast %c17_i32 : i32 to vector<4x128xi32>
    %390 = arith.cmpi eq, %4, %389 : vector<4x128xi32>
    %cst_94 = arith.constant 0.000000e+00 : f32
    %391 = vector.broadcast %cst_94 : f32 to vector<4x128xf32>
    %392 = arith.select %390, %199, %391 : vector<4x128xi1>, vector<4x128xf32>
    %cst_95 = arith.constant dense<0.000000e+00> : vector<4xf32>
    %393 = vector.multi_reduction <add>, %392, %cst_95 [1] : vector<4x128xf32> to vector<4xf32>
    %394 = vector.shape_cast %393 : vector<4xf32> to vector<4x1xf32>
    %c17_i32_96 = arith.constant 17 : i32
    %395 = vector.broadcast %c17_i32_96 : i32 to vector<4x128xi32>
    %396 = arith.cmpi eq, %200, %395 : vector<4x128xi32>
    %397 = vector.shape_cast %394 : vector<4x1xf32> to vector<4x1xf32>
    %398 = vector.broadcast %397 : vector<4x1xf32> to vector<4x128xf32>
    %399 = arith.select %396, %398, %388 : vector<4x128xi1>, vector<4x128xf32>
    %c18_i32 = arith.constant 18 : i32
    %400 = vector.broadcast %c18_i32 : i32 to vector<4x128xi32>
    %401 = arith.cmpi eq, %4, %400 : vector<4x128xi32>
    %cst_97 = arith.constant 0.000000e+00 : f32
    %402 = vector.broadcast %cst_97 : f32 to vector<4x128xf32>
    %403 = arith.select %401, %199, %402 : vector<4x128xi1>, vector<4x128xf32>
    %cst_98 = arith.constant dense<0.000000e+00> : vector<4xf32>
    %404 = vector.multi_reduction <add>, %403, %cst_98 [1] : vector<4x128xf32> to vector<4xf32>
    %405 = vector.shape_cast %404 : vector<4xf32> to vector<4x1xf32>
    %c18_i32_99 = arith.constant 18 : i32
    %406 = vector.broadcast %c18_i32_99 : i32 to vector<4x128xi32>
    %407 = arith.cmpi eq, %200, %406 : vector<4x128xi32>
    %408 = vector.shape_cast %405 : vector<4x1xf32> to vector<4x1xf32>
    %409 = vector.broadcast %408 : vector<4x1xf32> to vector<4x128xf32>
    %410 = arith.select %407, %409, %399 : vector<4x128xi1>, vector<4x128xf32>
    %c19_i32 = arith.constant 19 : i32
    %411 = vector.broadcast %c19_i32 : i32 to vector<4x128xi32>
    %412 = arith.cmpi eq, %4, %411 : vector<4x128xi32>
    %cst_100 = arith.constant 0.000000e+00 : f32
    %413 = vector.broadcast %cst_100 : f32 to vector<4x128xf32>
    %414 = arith.select %412, %199, %413 : vector<4x128xi1>, vector<4x128xf32>
    %cst_101 = arith.constant dense<0.000000e+00> : vector<4xf32>
    %415 = vector.multi_reduction <add>, %414, %cst_101 [1] : vector<4x128xf32> to vector<4xf32>
    %416 = vector.shape_cast %415 : vector<4xf32> to vector<4x1xf32>
    %c19_i32_102 = arith.constant 19 : i32
    %417 = vector.broadcast %c19_i32_102 : i32 to vector<4x128xi32>
    %418 = arith.cmpi eq, %200, %417 : vector<4x128xi32>
    %419 = vector.shape_cast %416 : vector<4x1xf32> to vector<4x1xf32>
    %420 = vector.broadcast %419 : vector<4x1xf32> to vector<4x128xf32>
    %421 = arith.select %418, %420, %410 : vector<4x128xi1>, vector<4x128xf32>
    %c20_i32 = arith.constant 20 : i32
    %422 = vector.broadcast %c20_i32 : i32 to vector<4x128xi32>
    %423 = arith.cmpi eq, %4, %422 : vector<4x128xi32>
    %cst_103 = arith.constant 0.000000e+00 : f32
    %424 = vector.broadcast %cst_103 : f32 to vector<4x128xf32>
    %425 = arith.select %423, %199, %424 : vector<4x128xi1>, vector<4x128xf32>
    %cst_104 = arith.constant dense<0.000000e+00> : vector<4xf32>
    %426 = vector.multi_reduction <add>, %425, %cst_104 [1] : vector<4x128xf32> to vector<4xf32>
    %427 = vector.shape_cast %426 : vector<4xf32> to vector<4x1xf32>
    %c20_i32_105 = arith.constant 20 : i32
    %428 = vector.broadcast %c20_i32_105 : i32 to vector<4x128xi32>
    %429 = arith.cmpi eq, %200, %428 : vector<4x128xi32>
    %430 = vector.shape_cast %427 : vector<4x1xf32> to vector<4x1xf32>
    %431 = vector.broadcast %430 : vector<4x1xf32> to vector<4x128xf32>
    %432 = arith.select %429, %431, %421 : vector<4x128xi1>, vector<4x128xf32>
    %c21_i32 = arith.constant 21 : i32
    %433 = vector.broadcast %c21_i32 : i32 to vector<4x128xi32>
    %434 = arith.cmpi eq, %4, %433 : vector<4x128xi32>
    %cst_106 = arith.constant 0.000000e+00 : f32
    %435 = vector.broadcast %cst_106 : f32 to vector<4x128xf32>
    %436 = arith.select %434, %199, %435 : vector<4x128xi1>, vector<4x128xf32>
    %cst_107 = arith.constant dense<0.000000e+00> : vector<4xf32>
    %437 = vector.multi_reduction <add>, %436, %cst_107 [1] : vector<4x128xf32> to vector<4xf32>
    %438 = vector.shape_cast %437 : vector<4xf32> to vector<4x1xf32>
    %c21_i32_108 = arith.constant 21 : i32
    %439 = vector.broadcast %c21_i32_108 : i32 to vector<4x128xi32>
    %440 = arith.cmpi eq, %200, %439 : vector<4x128xi32>
    %441 = vector.shape_cast %438 : vector<4x1xf32> to vector<4x1xf32>
    %442 = vector.broadcast %441 : vector<4x1xf32> to vector<4x128xf32>
    %443 = arith.select %440, %442, %432 : vector<4x128xi1>, vector<4x128xf32>
    %c22_i32 = arith.constant 22 : i32
    %444 = vector.broadcast %c22_i32 : i32 to vector<4x128xi32>
    %445 = arith.cmpi eq, %4, %444 : vector<4x128xi32>
    %cst_109 = arith.constant 0.000000e+00 : f32
    %446 = vector.broadcast %cst_109 : f32 to vector<4x128xf32>
    %447 = arith.select %445, %199, %446 : vector<4x128xi1>, vector<4x128xf32>
    %cst_110 = arith.constant dense<0.000000e+00> : vector<4xf32>
    %448 = vector.multi_reduction <add>, %447, %cst_110 [1] : vector<4x128xf32> to vector<4xf32>
    %449 = vector.shape_cast %448 : vector<4xf32> to vector<4x1xf32>
    %c22_i32_111 = arith.constant 22 : i32
    %450 = vector.broadcast %c22_i32_111 : i32 to vector<4x128xi32>
    %451 = arith.cmpi eq, %200, %450 : vector<4x128xi32>
    %452 = vector.shape_cast %449 : vector<4x1xf32> to vector<4x1xf32>
    %453 = vector.broadcast %452 : vector<4x1xf32> to vector<4x128xf32>
    %454 = arith.select %451, %453, %443 : vector<4x128xi1>, vector<4x128xf32>
    %c23_i32 = arith.constant 23 : i32
    %455 = vector.broadcast %c23_i32 : i32 to vector<4x128xi32>
    %456 = arith.cmpi eq, %4, %455 : vector<4x128xi32>
    %cst_112 = arith.constant 0.000000e+00 : f32
    %457 = vector.broadcast %cst_112 : f32 to vector<4x128xf32>
    %458 = arith.select %456, %199, %457 : vector<4x128xi1>, vector<4x128xf32>
    %cst_113 = arith.constant dense<0.000000e+00> : vector<4xf32>
    %459 = vector.multi_reduction <add>, %458, %cst_113 [1] : vector<4x128xf32> to vector<4xf32>
    %460 = vector.shape_cast %459 : vector<4xf32> to vector<4x1xf32>
    %c23_i32_114 = arith.constant 23 : i32
    %461 = vector.broadcast %c23_i32_114 : i32 to vector<4x128xi32>
    %462 = arith.cmpi eq, %200, %461 : vector<4x128xi32>
    %463 = vector.shape_cast %460 : vector<4x1xf32> to vector<4x1xf32>
    %464 = vector.broadcast %463 : vector<4x1xf32> to vector<4x128xf32>
    %465 = arith.select %462, %464, %454 : vector<4x128xi1>, vector<4x128xf32>
    %c24_i32 = arith.constant 24 : i32
    %466 = vector.broadcast %c24_i32 : i32 to vector<4x128xi32>
    %467 = arith.cmpi eq, %4, %466 : vector<4x128xi32>
    %cst_115 = arith.constant 0.000000e+00 : f32
    %468 = vector.broadcast %cst_115 : f32 to vector<4x128xf32>
    %469 = arith.select %467, %199, %468 : vector<4x128xi1>, vector<4x128xf32>
    %cst_116 = arith.constant dense<0.000000e+00> : vector<4xf32>
    %470 = vector.multi_reduction <add>, %469, %cst_116 [1] : vector<4x128xf32> to vector<4xf32>
    %471 = vector.shape_cast %470 : vector<4xf32> to vector<4x1xf32>
    %c24_i32_117 = arith.constant 24 : i32
    %472 = vector.broadcast %c24_i32_117 : i32 to vector<4x128xi32>
    %473 = arith.cmpi eq, %200, %472 : vector<4x128xi32>
    %474 = vector.shape_cast %471 : vector<4x1xf32> to vector<4x1xf32>
    %475 = vector.broadcast %474 : vector<4x1xf32> to vector<4x128xf32>
    %476 = arith.select %473, %475, %465 : vector<4x128xi1>, vector<4x128xf32>
    %c25_i32 = arith.constant 25 : i32
    %477 = vector.broadcast %c25_i32 : i32 to vector<4x128xi32>
    %478 = arith.cmpi eq, %4, %477 : vector<4x128xi32>
    %cst_118 = arith.constant 0.000000e+00 : f32
    %479 = vector.broadcast %cst_118 : f32 to vector<4x128xf32>
    %480 = arith.select %478, %199, %479 : vector<4x128xi1>, vector<4x128xf32>
    %cst_119 = arith.constant dense<0.000000e+00> : vector<4xf32>
    %481 = vector.multi_reduction <add>, %480, %cst_119 [1] : vector<4x128xf32> to vector<4xf32>
    %482 = vector.shape_cast %481 : vector<4xf32> to vector<4x1xf32>
    %c25_i32_120 = arith.constant 25 : i32
    %483 = vector.broadcast %c25_i32_120 : i32 to vector<4x128xi32>
    %484 = arith.cmpi eq, %200, %483 : vector<4x128xi32>
    %485 = vector.shape_cast %482 : vector<4x1xf32> to vector<4x1xf32>
    %486 = vector.broadcast %485 : vector<4x1xf32> to vector<4x128xf32>
    %487 = arith.select %484, %486, %476 : vector<4x128xi1>, vector<4x128xf32>
    %c26_i32 = arith.constant 26 : i32
    %488 = vector.broadcast %c26_i32 : i32 to vector<4x128xi32>
    %489 = arith.cmpi eq, %4, %488 : vector<4x128xi32>
    %cst_121 = arith.constant 0.000000e+00 : f32
    %490 = vector.broadcast %cst_121 : f32 to vector<4x128xf32>
    %491 = arith.select %489, %199, %490 : vector<4x128xi1>, vector<4x128xf32>
    %cst_122 = arith.constant dense<0.000000e+00> : vector<4xf32>
    %492 = vector.multi_reduction <add>, %491, %cst_122 [1] : vector<4x128xf32> to vector<4xf32>
    %493 = vector.shape_cast %492 : vector<4xf32> to vector<4x1xf32>
    %c26_i32_123 = arith.constant 26 : i32
    %494 = vector.broadcast %c26_i32_123 : i32 to vector<4x128xi32>
    %495 = arith.cmpi eq, %200, %494 : vector<4x128xi32>
    %496 = vector.shape_cast %493 : vector<4x1xf32> to vector<4x1xf32>
    %497 = vector.broadcast %496 : vector<4x1xf32> to vector<4x128xf32>
    %498 = arith.select %495, %497, %487 : vector<4x128xi1>, vector<4x128xf32>
    %c27_i32 = arith.constant 27 : i32
    %499 = vector.broadcast %c27_i32 : i32 to vector<4x128xi32>
    %500 = arith.cmpi eq, %4, %499 : vector<4x128xi32>
    %cst_124 = arith.constant 0.000000e+00 : f32
    %501 = vector.broadcast %cst_124 : f32 to vector<4x128xf32>
    %502 = arith.select %500, %199, %501 : vector<4x128xi1>, vector<4x128xf32>
    %cst_125 = arith.constant dense<0.000000e+00> : vector<4xf32>
    %503 = vector.multi_reduction <add>, %502, %cst_125 [1] : vector<4x128xf32> to vector<4xf32>
    %504 = vector.shape_cast %503 : vector<4xf32> to vector<4x1xf32>
    %c27_i32_126 = arith.constant 27 : i32
    %505 = vector.broadcast %c27_i32_126 : i32 to vector<4x128xi32>
    %506 = arith.cmpi eq, %200, %505 : vector<4x128xi32>
    %507 = vector.shape_cast %504 : vector<4x1xf32> to vector<4x1xf32>
    %508 = vector.broadcast %507 : vector<4x1xf32> to vector<4x128xf32>
    %509 = arith.select %506, %508, %498 : vector<4x128xi1>, vector<4x128xf32>
    %c28_i32 = arith.constant 28 : i32
    %510 = vector.broadcast %c28_i32 : i32 to vector<4x128xi32>
    %511 = arith.cmpi eq, %4, %510 : vector<4x128xi32>
    %cst_127 = arith.constant 0.000000e+00 : f32
    %512 = vector.broadcast %cst_127 : f32 to vector<4x128xf32>
    %513 = arith.select %511, %199, %512 : vector<4x128xi1>, vector<4x128xf32>
    %cst_128 = arith.constant dense<0.000000e+00> : vector<4xf32>
    %514 = vector.multi_reduction <add>, %513, %cst_128 [1] : vector<4x128xf32> to vector<4xf32>
    %515 = vector.shape_cast %514 : vector<4xf32> to vector<4x1xf32>
    %c28_i32_129 = arith.constant 28 : i32
    %516 = vector.broadcast %c28_i32_129 : i32 to vector<4x128xi32>
    %517 = arith.cmpi eq, %200, %516 : vector<4x128xi32>
    %518 = vector.shape_cast %515 : vector<4x1xf32> to vector<4x1xf32>
    %519 = vector.broadcast %518 : vector<4x1xf32> to vector<4x128xf32>
    %520 = arith.select %517, %519, %509 : vector<4x128xi1>, vector<4x128xf32>
    %c29_i32 = arith.constant 29 : i32
    %521 = vector.broadcast %c29_i32 : i32 to vector<4x128xi32>
    %522 = arith.cmpi eq, %4, %521 : vector<4x128xi32>
    %cst_130 = arith.constant 0.000000e+00 : f32
    %523 = vector.broadcast %cst_130 : f32 to vector<4x128xf32>
    %524 = arith.select %522, %199, %523 : vector<4x128xi1>, vector<4x128xf32>
    %cst_131 = arith.constant dense<0.000000e+00> : vector<4xf32>
    %525 = vector.multi_reduction <add>, %524, %cst_131 [1] : vector<4x128xf32> to vector<4xf32>
    %526 = vector.shape_cast %525 : vector<4xf32> to vector<4x1xf32>
    %c29_i32_132 = arith.constant 29 : i32
    %527 = vector.broadcast %c29_i32_132 : i32 to vector<4x128xi32>
    %528 = arith.cmpi eq, %200, %527 : vector<4x128xi32>
    %529 = vector.shape_cast %526 : vector<4x1xf32> to vector<4x1xf32>
    %530 = vector.broadcast %529 : vector<4x1xf32> to vector<4x128xf32>
    %531 = arith.select %528, %530, %520 : vector<4x128xi1>, vector<4x128xf32>
    %c30_i32 = arith.constant 30 : i32
    %532 = vector.broadcast %c30_i32 : i32 to vector<4x128xi32>
    %533 = arith.cmpi eq, %4, %532 : vector<4x128xi32>
    %cst_133 = arith.constant 0.000000e+00 : f32
    %534 = vector.broadcast %cst_133 : f32 to vector<4x128xf32>
    %535 = arith.select %533, %199, %534 : vector<4x128xi1>, vector<4x128xf32>
    %cst_134 = arith.constant dense<0.000000e+00> : vector<4xf32>
    %536 = vector.multi_reduction <add>, %535, %cst_134 [1] : vector<4x128xf32> to vector<4xf32>
    %537 = vector.shape_cast %536 : vector<4xf32> to vector<4x1xf32>
    %c30_i32_135 = arith.constant 30 : i32
    %538 = vector.broadcast %c30_i32_135 : i32 to vector<4x128xi32>
    %539 = arith.cmpi eq, %200, %538 : vector<4x128xi32>
    %540 = vector.shape_cast %537 : vector<4x1xf32> to vector<4x1xf32>
    %541 = vector.broadcast %540 : vector<4x1xf32> to vector<4x128xf32>
    %542 = arith.select %539, %541, %531 : vector<4x128xi1>, vector<4x128xf32>
    %c0_136 = arith.constant 0 : index
    %c0_137 = arith.constant 0 : index
    %543 = vector.load %arg6[%c0_136, %c0_137] : memref<4x128xf32, #tpu.memory_space<vmem>>, vector<4x128xf32>
    tpu.vector_store %arg6[%c0_136, %c0_137], %542 {strides = array<i32>} : memref<4x128xf32, #tpu.memory_space<vmem>>, vector<4x128xf32>,
    return
  }
  func.func @transform_0(%arg0: i32) -> (i32, i32) {
    %c0_i32 = arith.constant 0 : i32
    %c0_i32_0 = arith.constant 0 : i32
    return %arg0, %c0_i32 : i32, i32
  }
  func.func @transform_1(%arg0: i32) -> (i32, i32) {
    %c0_i32 = arith.constant 0 : i32
    %c0_i32_0 = arith.constant 0 : i32
    return %arg0, %c0_i32 : i32, i32
  }
  func.func @transform_2(%arg0: i32) -> (i32, i32) {
    %c0_i32 = arith.constant 0 : i32
    %c0_i32_0 = arith.constant 0 : i32
    return %arg0, %c0_i32 : i32, i32
  }
  func.func @transform_3(%arg0: i32) -> (i32, i32) {
    %c0_i32 = arith.constant 0 : i32
    %c0_i32_0 = arith.constant 0 : i32
    return %arg0, %c0_i32 : i32, i32
  }
  func.func @transform_4(%arg0: i32) -> (i32, i32) {
    %c0_i32 = arith.constant 0 : i32
    %c0_i32_0 = arith.constant 0 : i32
    return %arg0, %c0_i32 : i32, i32
  }
  func.func @transform_5(%arg0: i32) -> (i32, i32) {
    %c0_i32 = arith.constant 0 : i32
    %c0_i32_0 = arith.constant 0 : i32
    return %arg0, %c0_i32 : i32, i32
  }
}

</mosaic_0001>

<llo_original>
// kernel: tpu_custom_call.1
$region0: #{tpu_custom_call.1}
  #allocation0 [shape = 'u32[]', space=smem, size = 0x4, offset = 0x4, fixed_abs, tag = 'smem constant byte address 0x4 - core index']
  #allocation1 [shape = 'u32[72,128]{1,0:T(1,128)}', space=vmem, size = 0x9000, scoped, tag = 'internal scratch']
  %s0 = inlined_call_operand.hbm [shape: f32[4,16], index: 0, kind: input, shape index: {}]
  %s1 = inlined_call_operand.hbm [shape: f32[4,16], index: 1, kind: input, shape index: {}]
  %s2 = inlined_call_operand.hbm [shape: s32[4,128], index: 2, kind: input, shape index: {}]
  %s3 = inlined_call_operand.hbm [shape: s32[4,128], index: 3, kind: input, shape index: {}]
  %s4 = inlined_call_operand.hbm [shape: s32[4,128], index: 4, kind: input, shape index: {}]
  %s5 = inlined_call_operand.hbm [shape: f32[4,128], index: 5, kind: output, shape index: {}]
  %s6 = sld [smem:[#allocation0]]
  $region50: #{tpu_custom_call.1} parent=0
    _
  %s8 = ssub.s32 1, %s6
  %s9 = scalar_select 0, %s8, %s6
  $region1: #{tpu_custom_call.1} parent=0
    #allocation2 [shape = 'u8[2048]{0}', space=vmem, size = 0x800, scoped, tag = 'input window, operand 0, single buffered']
    #allocation3 [shape = 's32[1]{0}', space=sflag, size = 0x4, scoped, tag = 'scoped memory for tpu_custom_call.1']
    #allocation4 [shape = 's32[1]{0}', space=sflag, size = 0x4, scoped, tag = 'scoped memory for tpu_custom_call.1']
    #allocation5 [shape = 'u8[2048]{0}', space=vmem, size = 0x800, scoped, tag = 'input window, operand 1, single buffered']
    #allocation6 [shape = 's32[1]{0}', space=sflag, size = 0x4, scoped, tag = 'scoped memory for tpu_custom_call.1']
    #allocation7 [shape = 'u8[2048]{0}', space=vmem, size = 0x800, scoped, tag = 'input window, operand 2, single buffered']
    #allocation8 [shape = 'u8[2048]{0}', space=vmem, size = 0x800, scoped, tag = 'input window, operand 3, single buffered']
    #allocation9 [shape = 's32[1]{0}', space=sflag, size = 0x4, scoped, tag = 'scoped memory for tpu_custom_call.1']
    #allocation10 [shape = 'u8[2048]{0}', space=vmem, size = 0x800, scoped, tag = 'input window, operand 4, single buffered']
    #allocation11 [shape = 'u8[2048]{0}', space=vmem, size = 0x800, scoped, tag = 'output window, operand 0, single buffered']
    %10 = vsyncpa [#allocation3], 0
    %11 = vsyncpa [#allocation6], 0
    %12 = vsyncpa [#allocation9], 0
    %13 = vsyncpa [#allocation4], 0
    // Predicated region
    $region2: #{tpu_custom_call.1} parent=1 // pred_check
      _
    $region3: #{tpu_custom_call.1} parent=1 // pred_check_branch
      %15 = sbr.rel (0) target = $region5
    $region4: #{tpu_custom_call.1} parent=1 // pred_region
      %17 = vsyncadd [#allocation3], 0
      %s19 = sshll.u32 %s0, 4
      %s20 = int_to_ptr.hbm [resolvable:$true] %s19
      %s21 = sshll.u32 [#allocation2], 4
      %s22 = int_to_ptr.vmem [resolvable:$true] %s21
      %24 = dma.hbm_to_vmem [thread:$0]  %s20, 64, %s22, [#allocation3]
    $region5: #{tpu_custom_call.1} parent=1 // pred_fallthru
      _
    // Predicated region
    $region6: #{tpu_custom_call.1} parent=1 // pred_check
      _
    $region7: #{tpu_custom_call.1} parent=1 // pred_check_branch
      %26 = sbr.rel (0) target = $region9
    $region8: #{tpu_custom_call.1} parent=1 // pred_region
      %28 = vsyncadd [#allocation6], 0
      %s30 = sshll.u32 %s1, 4
      %s31 = int_to_ptr.hbm [resolvable:$true] %s30
      %s32 = sshll.u32 [#allocation5], 4
      %s33 = int_to_ptr.vmem [resolvable:$true] %s32
      %35 = dma.hbm_to_vmem [thread:$0]  %s31, 64, %s33, [#allocation6]
    $region9: #{tpu_custom_call.1} parent=1 // pred_fallthru
      _
    // Predicated region
    $region10: #{tpu_custom_call.1} parent=1 // pred_check
      _
    $region11: #{tpu_custom_call.1} parent=1 // pred_check_branch
      %37 = sbr.rel (0) target = $region13
    $region12: #{tpu_custom_call.1} parent=1 // pred_region
      %39 = vsyncadd [#allocation6], 0
      %s41 = sshll.u32 %s2, 4
      %s42 = int_to_ptr.hbm [resolvable:$true] %s41
      %s43 = sshll.u32 [#allocation7], 4
      %s44 = int_to_ptr.vmem [resolvable:$true] %s43
      %46 = dma.hbm_to_vmem [thread:$0]  %s42, 64, %s44, [#allocation6]
    $region13: #{tpu_custom_call.1} parent=1 // pred_fallthru
      _
    // Predicated region
    $region14: #{tpu_custom_call.1} parent=1 // pred_check
      _
    $region15: #{tpu_custom_call.1} parent=1 // pred_check_branch
      %48 = sbr.rel (0) target = $region17
    $region16: #{tpu_custom_call.1} parent=1 // pred_region
      %50 = vsyncadd [#allocation9], 0
      %s52 = sshll.u32 %s3, 4
      %s53 = int_to_ptr.hbm [resolvable:$true] %s52
      %s54 = sshll.u32 [#allocation8], 4
      %s55 = int_to_ptr.vmem [resolvable:$true] %s54
      %57 = dma.hbm_to_vmem [thread:$0]  %s53, 64, %s55, [#allocation9]
    $region17: #{tpu_custom_call.1} parent=1 // pred_fallthru
      _
    // Predicated region
    $region18: #{tpu_custom_call.1} parent=1 // pred_check
      _
    $region19: #{tpu_custom_call.1} parent=1 // pred_check_branch
      %59 = sbr.rel (0) target = $region21
    $region20: #{tpu_custom_call.1} parent=1 // pred_region
      %61 = vsyncadd [#allocation9], 0
      %s63 = sshll.u32 %s4, 4
      %s64 = int_to_ptr.hbm [resolvable:$true] %s63
      %s65 = sshll.u32 [#allocation10], 4
      %s66 = int_to_ptr.vmem [resolvable:$true] %s65
      %68 = dma.hbm_to_vmem [thread:$0]  %s64, 64, %s66, [#allocation9]
    $region21: #{tpu_custom_call.1} parent=1 // pred_fallthru
      _
    // Predicated region
    $region22: #{tpu_custom_call.1} parent=1 // pred_check
      _
    $region23: #{tpu_custom_call.1} parent=1 // pred_check_branch
      %70 = sbr.rel (0) target = $region25
    $region24: #{tpu_custom_call.1} parent=1 // pred_region
      %72 = dma.done [#allocation3], 64
    $region25: #{tpu_custom_call.1} parent=1 // pred_fallthru
      _
    // Predicated region
    $region26: #{tpu_custom_call.1} parent=1 // pred_check
      _
    $region27: #{tpu_custom_call.1} parent=1 // pred_check_branch
      %74 = sbr.rel (0) target = $region29
    $region28: #{tpu_custom_call.1} parent=1 // pred_region
      %76 = dma.done [#allocation6], 64
    $region29: #{tpu_custom_call.1} parent=1 // pred_fallthru
      _
    // Predicated region
    $region30: #{tpu_custom_call.1} parent=1 // pred_check
      _
    $region31: #{tpu_custom_call.1} parent=1 // pred_check_branch
      %78 = sbr.rel (0) target = $region33
    $region32: #{tpu_custom_call.1} parent=1 // pred_region
      %80 = dma.done [#allocation6], 64
    $region33: #{tpu_custom_call.1} parent=1 // pred_fallthru
      _
    // Predicated region
    $region34: #{tpu_custom_call.1} parent=1 // pred_check
      _
    $region35: #{tpu_custom_call.1} parent=1 // pred_check_branch
      %82 = sbr.rel (0) target = $region37
    $region36: #{tpu_custom_call.1} parent=1 // pred_region
      %84 = dma.done [#allocation9], 64
    $region37: #{tpu_custom_call.1} parent=1 // pred_fallthru
      _
    // Predicated region
    $region38: #{tpu_custom_call.1} parent=1 // pred_check
      _
    $region39: #{tpu_custom_call.1} parent=1 // pred_check_branch
      %86 = sbr.rel (0) target = $region41
    $region40: #{tpu_custom_call.1} parent=1 // pred_region
      %88 = dma.done [#allocation9], 64
    $region41: #{tpu_custom_call.1} parent=1 // pred_fallthru
      _
    %v89 = vld [vmem:[#allocation2] sm:$0xf]
    %v90 = vld [vmem:[#allocation5] sm:$0xf]
    %v91 = vld [vmem:[#allocation7] sm:$0xf]
    %v92 = vld [vmem:[#allocation8] sm:$0xf]
    %v93 = vld [vmem:[#allocation10] sm:$0xf]
    %vm94 = vcmp.eq.s32.totalorder %v91, 0
    %96 = vset.pattern.permute.xlu0 0
    %97 = vperm.xlu0 %96, %v89
    %v98 = vpop.permute.xlu0 %97
    %v100 = vsel %vm94, %v98, 0.0
    %vm101 = vcmp.eq.s32.totalorder %v92, 0
    %103 = vset.pattern.permute.xlu0 0
    %104 = vperm.xlu0 %103, %v90
    %v105 = vpop.permute.xlu0 %104
    %v107 = vsel %vm101, %v105, 0.0
    %vm108 = vcmp.eq.s32.totalorder %v91, 1
    %109 = vset.pattern.permute.xlu0 1
    %110 = vperm.xlu0 %109, %v89
    %v111 = vpop.permute.xlu0 %110
    %v113 = vsel %vm108, %v111, %v100
    %vm114 = vcmp.eq.s32.totalorder %v92, 1
    %115 = vset.pattern.permute.xlu0 1
    %116 = vperm.xlu0 %115, %v90
    %v117 = vpop.permute.xlu0 %116
    %v119 = vsel %vm114, %v117, %v107
    %vm120 = vcmp.eq.s32.totalorder %v91, 2
    %121 = vset.pattern.permute.xlu0 2
    %122 = vperm.xlu0 %121, %v89
    %v123 = vpop.permute.xlu0 %122
    %v125 = vsel %vm120, %v123, %v113
    %vm126 = vcmp.eq.s32.totalorder %v92, 2
    %127 = vset.pattern.permute.xlu0 2
    %128 = vperm.xlu0 %127, %v90
    %v129 = vpop.permute.xlu0 %128
    %v131 = vsel %vm126, %v129, %v119
    %vm132 = vcmp.eq.s32.totalorder %v91, 3
    %133 = vset.pattern.permute.xlu0 3
    %134 = vperm.xlu0 %133, %v89
    %v135 = vpop.permute.xlu0 %134
    %v137 = vsel %vm132, %v135, %v125
    %vm138 = vcmp.eq.s32.totalorder %v92, 3
    %139 = vset.pattern.permute.xlu0 3
    %140 = vperm.xlu0 %139, %v90
    %v141 = vpop.permute.xlu0 %140
    %v143 = vsel %vm138, %v141, %v131
    %vm144 = vcmp.eq.s32.totalorder %v91, 4
    %145 = vset.pattern.permute.xlu0 4
    %146 = vperm.xlu0 %145, %v89
    %v147 = vpop.permute.xlu0 %146
    %v149 = vsel %vm144, %v147, %v137
    %vm150 = vcmp.eq.s32.totalorder %v92, 4
    %151 = vset.pattern.permute.xlu0 4
    %152 = vperm.xlu0 %151, %v90
    %v153 = vpop.permute.xlu0 %152
    %v155 = vsel %vm150, %v153, %v143
    %vm156 = vcmp.eq.s32.totalorder %v91, 5
    %157 = vset.pattern.permute.xlu0 5
    %158 = vperm.xlu0 %157, %v89
    %v159 = vpop.permute.xlu0 %158
    %v161 = vsel %vm156, %v159, %v149
    %vm162 = vcmp.eq.s32.totalorder %v92, 5
    %163 = vset.pattern.permute.xlu0 5
    %164 = vperm.xlu0 %163, %v90
    %v165 = vpop.permute.xlu0 %164
    %v167 = vsel %vm162, %v165, %v155
    %vm168 = vcmp.eq.s32.totalorder %v91, 6
    %169 = vset.pattern.permute.xlu0 6
    %170 = vperm.xlu0 %169, %v89
    %v171 = vpop.permute.xlu0 %170
    %v173 = vsel %vm168, %v171, %v161
    %vm174 = vcmp.eq.s32.totalorder %v92, 6
    %175 = vset.pattern.permute.xlu0 6
    %176 = vperm.xlu0 %175, %v90
    %v177 = vpop.permute.xlu0 %176
    %v179 = vsel %vm174, %v177, %v167
    %vm180 = vcmp.eq.s32.totalorder %v91, 7
    %181 = vset.pattern.permute.xlu0 7
    %182 = vperm.xlu0 %181, %v89
    %v183 = vpop.permute.xlu0 %182
    %v185 = vsel %vm180, %v183, %v173
    %vm186 = vcmp.eq.s32.totalorder %v92, 7
    %187 = vset.pattern.permute.xlu0 7
    %188 = vperm.xlu0 %187, %v90
    %v189 = vpop.permute.xlu0 %188
    %v191 = vsel %vm186, %v189, %v179
    %vm192 = vcmp.eq.s32.totalorder %v91, 8
    %193 = vset.pattern.permute.xlu0 8
    %194 = vperm.xlu0 %193, %v89
    %v195 = vpop.permute.xlu0 %194
    %v197 = vsel %vm192, %v195, %v185
    %vm198 = vcmp.eq.s32.totalorder %v92, 8
    %199 = vset.pattern.permute.xlu0 8
    %200 = vperm.xlu0 %199, %v90
    %v201 = vpop.permute.xlu0 %200
    %v203 = vsel %vm198, %v201, %v191
    %vm204 = vcmp.eq.s32.totalorder %v91, 9
    %205 = vset.pattern.permute.xlu0 9
    %206 = vperm.xlu0 %205, %v89
    %v207 = vpop.permute.xlu0 %206
    %v209 = vsel %vm204, %v207, %v197
    %vm210 = vcmp.eq.s32.totalorder %v92, 9
    %211 = vset.pattern.permute.xlu0 9
    %212 = vperm.xlu0 %211, %v90
    %v213 = vpop.permute.xlu0 %212
    %v215 = vsel %vm210, %v213, %v203
    %vm216 = vcmp.eq.s32.totalorder %v91, 10
    %217 = vset.pattern.permute.xlu0 10
    %218 = vperm.xlu0 %217, %v89
    %v219 = vpop.permute.xlu0 %218
    %v221 = vsel %vm216, %v219, %v209
    %vm222 = vcmp.eq.s32.totalorder %v92, 10
    %223 = vset.pattern.permute.xlu0 10
    %224 = vperm.xlu0 %223, %v90
    %v225 = vpop.permute.xlu0 %224
    %v227 = vsel %vm222, %v225, %v215
    %vm228 = vcmp.eq.s32.totalorder %v91, 11
    %229 = vset.pattern.permute.xlu0 11
    %230 = vperm.xlu0 %229, %v89
    %v231 = vpop.permute.xlu0 %230
    %v233 = vsel %vm228, %v231, %v221
    %vm234 = vcmp.eq.s32.totalorder %v92, 11
    %235 = vset.pattern.permute.xlu0 11
    %236 = vperm.xlu0 %235, %v90
    %v237 = vpop.permute.xlu0 %236
    %v239 = vsel %vm234, %v237, %v227
    %vm240 = vcmp.eq.s32.totalorder %v91, 12
    %241 = vset.pattern.permute.xlu0 12
    %242 = vperm.xlu0 %241, %v89
    %v243 = vpop.permute.xlu0 %242
    %v245 = vsel %vm240, %v243, %v233
    %vm246 = vcmp.eq.s32.totalorder %v92, 12
    %247 = vset.pattern.permute.xlu0 12
    %248 = vperm.xlu0 %247, %v90
    %v249 = vpop.permute.xlu0 %248
    %v251 = vsel %vm246, %v249, %v239
    %vm252 = vcmp.eq.s32.totalorder %v91, 13
    %253 = vset.pattern.permute.xlu0 13
    %254 = vperm.xlu0 %253, %v89
    %v255 = vpop.permute.xlu0 %254
    %v257 = vsel %vm252, %v255, %v245
    %vm258 = vcmp.eq.s32.totalorder %v92, 13
    %259 = vset.pattern.permute.xlu0 13
    %260 = vperm.xlu0 %259, %v90
    %v261 = vpop.permute.xlu0 %260
    %v263 = vsel %vm258, %v261, %v251
    %vm264 = vcmp.eq.s32.totalorder %v91, 14
    %265 = vset.pattern.permute.xlu0 14
    %266 = vperm.xlu0 %265, %v89
    %v267 = vpop.permute.xlu0 %266
    %v269 = vsel %vm264, %v267, %v257
    %vm270 = vcmp.eq.s32.totalorder %v92, 14
    %271 = vset.pattern.permute.xlu0 14
    %272 = vperm.xlu0 %271, %v90
    %v273 = vpop.permute.xlu0 %272
    %v275 = vsel %vm270, %v273, %v263
    %vm276 = vcmp.eq.s32.totalorder %v91, 15
    %277 = vset.pattern.permute.xlu0 15
    %278 = vperm.xlu0 %277, %v89
    %v279 = vpop.permute.xlu0 %278
    %v281 = vsel %vm276, %v279, %v269
    %vm282 = vcmp.eq.s32.totalorder %v92, 15
    %283 = vset.pattern.permute.xlu0 15
    %284 = vperm.xlu0 %283, %v90
    %v285 = vpop.permute.xlu0 %284
    %v287 = vsel %vm282, %v285, %v275
    %v288 = vmul.f32 %v281, %v287
    %v289 = vlaneseq
    %v290 = vand.u32 %v289, 127
    %vm291 = vcmp.eq.s32.totalorder %v93, 0
    %v292 = vsel %vm291, %v288, 0.0
    %vm293 = vcmask 1043456
    %v294 = vsel %vm293, %v292, 0.0
    %295 = vadd.xlane.f32.xlu0 %v294
    %v296 = vpop.xlane.xlu0 %295
    %vm297 = vcmp.eq.s32.totalorder %v290, 0
    %v298 = vsel %vm297, %v296, 0.0
    %vm299 = vcmp.eq.s32.totalorder %v93, 1
    %v300 = vsel %vm299, %v288, 0.0
    %v301 = vsel %vm293, %v300, 0.0
    %302 = vadd.xlane.f32.xlu0 %v301
    %v303 = vpop.xlane.xlu0 %302
    %vm304 = vcmp.eq.s32.totalorder %v290, 1
    %v305 = vsel %vm304, %v303, %v298
    %vm306 = vcmp.eq.s32.totalorder %v93, 2
    %v307 = vsel %vm306, %v288, 0.0
    %v308 = vsel %vm293, %v307, 0.0
    %309 = vadd.xlane.f32.xlu0 %v308
    %v310 = vpop.xlane.xlu0 %309
    %vm311 = vcmp.eq.s32.totalorder %v290, 2
    %v312 = vsel %vm311, %v310, %v305
    %vm313 = vcmp.eq.s32.totalorder %v93, 3
    %v314 = vsel %vm313, %v288, 0.0
    %v315 = vsel %vm293, %v314, 0.0
    %316 = vadd.xlane.f32.xlu0 %v315
    %v317 = vpop.xlane.xlu0 %316
    %vm318 = vcmp.eq.s32.totalorder %v290, 3
    %v319 = vsel %vm318, %v317, %v312
    %vm320 = vcmp.eq.s32.totalorder %v93, 4
    %v321 = vsel %vm320, %v288, 0.0
    %v322 = vsel %vm293, %v321, 0.0
    %323 = vadd.xlane.f32.xlu0 %v322
    %v324 = vpop.xlane.xlu0 %323
    %vm325 = vcmp.eq.s32.totalorder %v290, 4
    %v326 = vsel %vm325, %v324, %v319
    %vm327 = vcmp.eq.s32.totalorder %v93, 5
    %v328 = vsel %vm327, %v288, 0.0
    %v329 = vsel %vm293, %v328, 0.0
    %330 = vadd.xlane.f32.xlu0 %v329
    %v331 = vpop.xlane.xlu0 %330
    %vm332 = vcmp.eq.s32.totalorder %v290, 5
    %v333 = vsel %vm332, %v331, %v326
    %vm334 = vcmp.eq.s32.totalorder %v93, 6
    %v335 = vsel %vm334, %v288, 0.0
    %v336 = vsel %vm293, %v335, 0.0
    %337 = vadd.xlane.f32.xlu0 %v336
    %v338 = vpop.xlane.xlu0 %337
    %vm339 = vcmp.eq.s32.totalorder %v290, 6
    %v340 = vsel %vm339, %v338, %v333
    %vm341 = vcmp.eq.s32.totalorder %v93, 7
    %v342 = vsel %vm341, %v288, 0.0
    %v343 = vsel %vm293, %v342, 0.0
    %344 = vadd.xlane.f32.xlu0 %v343
    %v345 = vpop.xlane.xlu0 %344
    %vm346 = vcmp.eq.s32.totalorder %v290, 7
    %v347 = vsel %vm346, %v345, %v340
    %vm348 = vcmp.eq.s32.totalorder %v93, 8
    %v349 = vsel %vm348, %v288, 0.0
    %v350 = vsel %vm293, %v349, 0.0
    %351 = vadd.xlane.f32.xlu0 %v350
    %v352 = vpop.xlane.xlu0 %351
    %vm353 = vcmp.eq.s32.totalorder %v290, 8
    %v354 = vsel %vm353, %v352, %v347
    %vm355 = vcmp.eq.s32.totalorder %v93, 9
    %v356 = vsel %vm355, %v288, 0.0
    %v357 = vsel %vm293, %v356, 0.0
    %358 = vadd.xlane.f32.xlu0 %v357
    %v359 = vpop.xlane.xlu0 %358
    %vm360 = vcmp.eq.s32.totalorder %v290, 9
    %v361 = vsel %vm360, %v359, %v354
    %vm362 = vcmp.eq.s32.totalorder %v93, 10
    %v363 = vsel %vm362, %v288, 0.0
    %v364 = vsel %vm293, %v363, 0.0
    %365 = vadd.xlane.f32.xlu0 %v364
    %v366 = vpop.xlane.xlu0 %365
    %vm367 = vcmp.eq.s32.totalorder %v290, 10
    %v368 = vsel %vm367, %v366, %v361
    %vm369 = vcmp.eq.s32.totalorder %v93, 11
    %v370 = vsel %vm369, %v288, 0.0
    %v371 = vsel %vm293, %v370, 0.0
    %372 = vadd.xlane.f32.xlu0 %v371
    %v373 = vpop.xlane.xlu0 %372
    %vm374 = vcmp.eq.s32.totalorder %v290, 11
    %v375 = vsel %vm374, %v373, %v368
    %vm376 = vcmp.eq.s32.totalorder %v93, 12
    %v377 = vsel %vm376, %v288, 0.0
    %v378 = vsel %vm293, %v377, 0.0
    %379 = vadd.xlane.f32.xlu0 %v378
    %v380 = vpop.xlane.xlu0 %379
    %vm381 = vcmp.eq.s32.totalorder %v290, 12
    %v382 = vsel %vm381, %v380, %v375
    %vm383 = vcmp.eq.s32.totalorder %v93, 13
    %v384 = vsel %vm383, %v288, 0.0
    %v385 = vsel %vm293, %v384, 0.0
    %386 = vadd.xlane.f32.xlu0 %v385
    %v387 = vpop.xlane.xlu0 %386
    %vm388 = vcmp.eq.s32.totalorder %v290, 13
    %v389 = vsel %vm388, %v387, %v382
    %vm390 = vcmp.eq.s32.totalorder %v93, 14
    %v391 = vsel %vm390, %v288, 0.0
    %v392 = vsel %vm293, %v391, 0.0
    %393 = vadd.xlane.f32.xlu0 %v392
    %v394 = vpop.xlane.xlu0 %393
    %vm395 = vcmp.eq.s32.totalorder %v290, 14
    %v396 = vsel %vm395, %v394, %v389
    %vm397 = vcmp.eq.s32.totalorder %v93, 15
    %v398 = vsel %vm397, %v288, 0.0
    %v399 = vsel %vm293, %v398, 0.0
    %400 = vadd.xlane.f32.xlu0 %v399
    %v401 = vpop.xlane.xlu0 %400
    %vm402 = vcmp.eq.s32.totalorder %v290, 15
    %v403 = vsel %vm402, %v401, %v396
    %vm404 = vcmp.eq.s32.totalorder %v93, 16
    %v405 = vsel %vm404, %v288, 0.0
    %v406 = vsel %vm293, %v405, 0.0
    %407 = vadd.xlane.f32.xlu0 %v406
    %v408 = vpop.xlane.xlu0 %407
    %vm409 = vcmp.eq.s32.totalorder %v290, 16
    %v410 = vsel %vm409, %v408, %v403
    %vm411 = vcmp.eq.s32.totalorder %v93, 17
    %v412 = vsel %vm411, %v288, 0.0
    %v413 = vsel %vm293, %v412, 0.0
    %414 = vadd.xlane.f32.xlu0 %v413
    %v415 = vpop.xlane.xlu0 %414
    %vm416 = vcmp.eq.s32.totalorder %v290, 17
    %v417 = vsel %vm416, %v415, %v410
    %vm418 = vcmp.eq.s32.totalorder %v93, 18
    %v419 = vsel %vm418, %v288, 0.0
    %v420 = vsel %vm293, %v419, 0.0
    %421 = vadd.xlane.f32.xlu0 %v420
    %v422 = vpop.xlane.xlu0 %421
    %vm423 = vcmp.eq.s32.totalorder %v290, 18
    %v424 = vsel %vm423, %v422, %v417
    %vm425 = vcmp.eq.s32.totalorder %v93, 19
    %v426 = vsel %vm425, %v288, 0.0
    %v427 = vsel %vm293, %v426, 0.0
    %428 = vadd.xlane.f32.xlu0 %v427
    %v429 = vpop.xlane.xlu0 %428
    %vm430 = vcmp.eq.s32.totalorder %v290, 19
    %v431 = vsel %vm430, %v429, %v424
    %vm432 = vcmp.eq.s32.totalorder %v93, 20
    %v433 = vsel %vm432, %v288, 0.0
    %v434 = vsel %vm293, %v433, 0.0
    %435 = vadd.xlane.f32.xlu0 %v434
    %v436 = vpop.xlane.xlu0 %435
    %vm437 = vcmp.eq.s32.totalorder %v290, 20
    %v438 = vsel %vm437, %v436, %v431
    %vm439 = vcmp.eq.s32.totalorder %v93, 21
    %v440 = vsel %vm439, %v288, 0.0
    %v441 = vsel %vm293, %v440, 0.0
    %442 = vadd.xlane.f32.xlu0 %v441
    %v443 = vpop.xlane.xlu0 %442
    %vm444 = vcmp.eq.s32.totalorder %v290, 21
    %v445 = vsel %vm444, %v443, %v438
    %vm446 = vcmp.eq.s32.totalorder %v93, 22
    %v447 = vsel %vm446, %v288, 0.0
    %v448 = vsel %vm293, %v447, 0.0
    %449 = vadd.xlane.f32.xlu0 %v448
    %v450 = vpop.xlane.xlu0 %449
    %vm451 = vcmp.eq.s32.totalorder %v290, 22
    %v452 = vsel %vm451, %v450, %v445
    %vm453 = vcmp.eq.s32.totalorder %v93, 23
    %v454 = vsel %vm453, %v288, 0.0
    %v455 = vsel %vm293, %v454, 0.0
    %456 = vadd.xlane.f32.xlu0 %v455
    %v457 = vpop.xlane.xlu0 %456
    %vm458 = vcmp.eq.s32.totalorder %v290, 23
    %v459 = vsel %vm458, %v457, %v452
    %vm460 = vcmp.eq.s32.totalorder %v93, 24
    %v461 = vsel %vm460, %v288, 0.0
    %v462 = vsel %vm293, %v461, 0.0
    %463 = vadd.xlane.f32.xlu0 %v462
    %v464 = vpop.xlane.xlu0 %463
    %vm465 = vcmp.eq.s32.totalorder %v290, 24
    %v466 = vsel %vm465, %v464, %v459
    %vm467 = vcmp.eq.s32.totalorder %v93, 25
    %v468 = vsel %vm467, %v288, 0.0
    %v469 = vsel %vm293, %v468, 0.0
    %470 = vadd.xlane.f32.xlu0 %v469
    %v471 = vpop.xlane.xlu0 %470
    %vm472 = vcmp.eq.s32.totalorder %v290, 25
    %v473 = vsel %vm472, %v471, %v466
    %vm474 = vcmp.eq.s32.totalorder %v93, 26
    %v475 = vsel %vm474, %v288, 0.0
    %v476 = vsel %vm293, %v475, 0.0
    %477 = vadd.xlane.f32.xlu0 %v476
    %v478 = vpop.xlane.xlu0 %477
    %vm479 = vcmp.eq.s32.totalorder %v290, 26
    %v480 = vsel %vm479, %v478, %v473
    %vm481 = vcmp.eq.s32.totalorder %v93, 27
    %v482 = vsel %vm481, %v288, 0.0
    %v483 = vsel %vm293, %v482, 0.0
    %484 = vadd.xlane.f32.xlu0 %v483
    %v485 = vpop.xlane.xlu0 %484
    %vm486 = vcmp.eq.s32.totalorder %v290, 27
    %v487 = vsel %vm486, %v485, %v480
    %vm488 = vcmp.eq.s32.totalorder %v93, 28
    %v489 = vsel %vm488, %v288, 0.0
    %v490 = vsel %vm293, %v489, 0.0
    %491 = vadd.xlane.f32.xlu0 %v490
    %v492 = vpop.xlane.xlu0 %491
    %vm493 = vcmp.eq.s32.totalorder %v290, 28
    %v494 = vsel %vm493, %v492, %v487
    %vm495 = vcmp.eq.s32.totalorder %v93, 29
    %v496 = vsel %vm495, %v288, 0.0
    %v497 = vsel %vm293, %v496, 0.0
    %498 = vadd.xlane.f32.xlu0 %v497
    %v499 = vpop.xlane.xlu0 %498
    %vm500 = vcmp.eq.s32.totalorder %v290, 29
    %v501 = vsel %vm500, %v499, %v494
    %vm502 = vcmp.eq.s32.totalorder %v93, 30
    %v503 = vsel %vm502, %v288, 0.0
    %v504 = vsel %vm293, %v503, 0.0
    %505 = vadd.xlane.f32.xlu0 %v504
    %v506 = vpop.xlane.xlu0 %505
    %vm507 = vcmp.eq.s32.totalorder %v290, 30
    %v508 = vsel %vm507, %v506, %v501
    %509 = vst [vmem:[#allocation11] sm:$0xf] %v508
    // Predicated region
    $region42: #{tpu_custom_call.1} parent=1 // pred_check
      _
    $region43: #{tpu_custom_call.1} parent=1 // pred_check_branch
      %511 = sbr.rel (0) target = $region45
    $region44: #{tpu_custom_call.1} parent=1 // pred_region
      %513 = vsyncadd [#allocation4], 0
      %s515 = sshll.u32 [#allocation11], 4
      %s516 = int_to_ptr.vmem [resolvable:$true] %s515
      %s517 = sshll.u32 %s5, 4
      %s518 = int_to_ptr.hbm [resolvable:$true] %s517
      %520 = dma.vmem_to_hbm [thread:$0]  %s516, 64, %s518, [#allocation4]
    $region45: #{tpu_custom_call.1} parent=1 // pred_fallthru
      _
    // Predicated region
    $region46: #{tpu_custom_call.1} parent=1 // pred_check
      _
    $region47: #{tpu_custom_call.1} parent=1 // pred_check_branch
      %522 = sbr.rel (0) target = $region49
    $region48: #{tpu_custom_call.1} parent=1 // pred_region
      %524 = dma.done [#allocation4], 64
    $region49: #{tpu_custom_call.1} parent=1 // pred_fallthru
      _
    %525 = vsyncpa [#allocation3], 1
    %526 = vsyncpa [#allocation6], 1
    %527 = vsyncpa [#allocation9], 1
    %528 = vsyncpa [#allocation4], 1

</llo_original>
